<compile_context>
chip_gen: v7x
topology: tpu7x:2x2x1
jax: 0.10.0
libtpu: 0.0.40
codegen_flags: <defaults>
</compile_context>

<pallas_src>
import math

import jax
import jax.numpy as jnp
from jax.experimental import pallas as pl
from jax.experimental.pallas import tpu as pltpu

# ----- module hyper-parameters (small synthetic shapes) -----
B, L = 2, 8                     # batch, sequence length
D_MODEL, N_HEADS, D_FF, KSIZE = 32, 4, 64, 3
D_HEAD = D_MODEL // N_HEADS
EPS = 1e-5

# ----- packed parameter-slab layout (row offsets are 8-aligned; PCOLS lanes) -----
PCOLS  = 3 * D_MODEL                 # 96
R_WQKV = 0                           # (KSIZE*D, 3D)  fused conv weight (Q pre-scaled)
R_BQKV = KSIZE * D_MODEL             # 96  : (1, 3D)  fused conv bias   (Q pre-scaled)
R_WO   = R_BQKV + 8                  # 104 : (D, D)   output projection
R_W1   = R_WO + D_MODEL              # 136 : (D, D_FF)
R_B1   = R_W1 + D_MODEL              # 168 : (1, D_FF)
R_W2   = R_B1 + 8                    # 176 : (D_FF, D)
R_VEC  = R_W2 + D_FF                 # 240 : (6, D) = bo, g1, bt1, b2, g2, bt2
P_ROWS = R_VEC + 8                   # 248


def encoder_layer_kernel(x_ref, p_ref, out_ref):
    f32 = jnp.float32
    rows = x_ref.shape[0]            # seqs_per_block * L (folded rows)
    nb = rows // L                   # sequences handled in this grid step
    x = x_ref[...]                   # (rows, D_MODEL)

    # ---- static slices into the single packed parameter slab (one DMA, one buffer)
    w_qkv = p_ref[R_WQKV:R_WQKV + KSIZE * D_MODEL, :]          # (K*D, 3D)
    b_qkv = p_ref[R_BQKV:R_BQKV + 1, :]                        # (1, 3D)
    wo    = p_ref[R_WO:R_WO + D_MODEL, 0:D_MODEL]              # (D, D)
    w1    = p_ref[R_W1:R_W1 + D_MODEL, 0:D_FF]                 # (D, D_FF)
    b1    = p_ref[R_B1:R_B1 + 1, 0:D_FF]                       # (1, D_FF)
    w2    = p_ref[R_W2:R_W2 + D_FF, 0:D_MODEL]                 # (D_FF, D)
    vec   = p_ref[R_VEC:R_VEC + 6, 0:D_MODEL]                  # (6, D)
    bo, g1, bt1, b2, g2, bt2 = (vec[i:i + 1, :] for i in range(6))

    # ---- im2col for the depth-mixing Conv1d ('same' padding), sequence-boundary aware
    pad = KSIZE // 2
    pos = jax.lax.broadcasted_iota(jnp.int32, (rows, D_MODEL), 0)
    pos_in_seq = pos                 # position within each length-L sequence
    for b in range(1, nb):           # static unroll; no vector modulo needed
        pos_in_seq = pos_in_seq - jnp.where(pos >= b * L,
                                            jnp.int32(L), jnp.int32(0))

    cols = []
    for k in range(KSIZE):           # static unroll over kernel taps
        o = k - pad
        if o == 0:
            cols.append(x)
            continue
        shifted = jnp.roll(x, -o, axis=0)          # wrapped rows are masked below
        valid = (pos_in_seq < (L - o)) if o > 0 else (pos_in_seq >= -o)
        cols.append(jnp.where(valid, shifted, 0.0))
    slab = jnp.concatenate(cols, axis=-1)          # (rows, KSIZE*D_MODEL)

    # ---- fused Q/K/V projection: a single 96-deep MXU matmul (Q scale pre-folded)
    qkv = jnp.dot(slab, w_qkv, preferred_element_type=f32) + b_qkv   # (rows, 3D)

    # ---- head split: one reshape + one transpose per tensor (no per-head slicing)
    def split_heads(m):                             # (rows, D) -> (nb*H, L, Dh)
        m4 = m.reshape(nb, L, N_HEADS, D_HEAD)
        m4 = jnp.transpose(m4, (0, 2, 1, 3))
        return m4.reshape(nb * N_HEADS, L, D_HEAD)

    qh = split_heads(qkv[:, 0:D_MODEL])             # already scaled by 1/sqrt(Dh)
    kh = split_heads(qkv[:, D_MODEL:2 * D_MODEL])
    vh = split_heads(qkv[:, 2 * D_MODEL:3 * D_MODEL])

    s = jnp.einsum('iqd,ikd->iqk', qh, kh, preferred_element_type=f32)
    s = s - jnp.max(s, axis=-1, keepdims=True)
    p = jnp.exp(s)
    # NOTE: exact divide kept (instead of pl.reciprocal(approx=True)) to preserve
    # 1e-4 numerical parity with the reference at negligible cost at these shapes.
    p = p / jnp.sum(p, axis=-1, keepdims=True)
    o_h = jnp.einsum('iqk,ikd->iqd', p, vh, preferred_element_type=f32)

    # ---- head merge (one transpose) + single (rows,D)@(D,D) output projection
    ctx = jnp.transpose(o_h.reshape(nb, N_HEADS, L, D_HEAD), (0, 2, 1, 3))
    ctx = ctx.reshape(rows, D_MODEL)
    attn = jnp.dot(ctx, wo, preferred_element_type=f32) + bo

    def layer_norm(z, g, bt):
        mu = jnp.mean(z, axis=-1, keepdims=True)
        var = jnp.mean((z - mu) ** 2, axis=-1, keepdims=True)
        return (z - mu) * jax.lax.rsqrt(var + EPS) * g + bt

    # TODO(synk): dropout layers are identity (inference mode); no RNG applied.
    y = layer_norm(x + attn, g1, bt1)

    # ---- feed-forward: Linear -> ReLU -> Linear ----
    h1 = jnp.maximum(jnp.dot(y, w1, preferred_element_type=f32) + b1, 0.0)
    ff = jnp.dot(h1, w2, preferred_element_type=f32) + b2

    out_ref[...] = layer_norm(y + ff, g2, bt2)


def encoder_layer(x, params, *, seqs_per_block=None):
    b_, l_, d_ = x.shape
    if seqs_per_block is None:
        # Fold the whole batch into one grid step.  At these shapes the kernel is
        # launch/DMA bound, so even on 2-TC v7x keeping grid=(1,) wins; only split
        # (seqs_per_block = b_//2) once per-core work reaches several microseconds.
        seqs_per_block = b_
    assert b_ % seqs_per_block == 0 and l_ == L and d_ == D_MODEL

    (wq, bq, wk, bk, wv, bv, wo, bo, g1, bt1, w1, b1, w2, b2, g2, bt2) = params

    # ---- pack ALL parameters into ONE slab (wrapper-side, free); fold 1/sqrt(Dh)
    #      into the Q columns of the fused conv weight/bias.
    scale = 1.0 / math.sqrt(D_HEAD)
    w_qkv = jnp.concatenate([wq * scale, wk, wv], axis=-1).reshape(KSIZE * d_, 3 * d_)
    b_qkv = jnp.concatenate([bq * scale, bk, bv], axis=-1)           # (1, 3D)
    vec = jnp.concatenate([bo, g1, bt1, b2, g2, bt2], axis=0)        # (6, D)

    slab = jnp.zeros((P_ROWS, PCOLS), jnp.float32)
    slab = slab.at[R_WQKV:R_WQKV + KSIZE * d_, :].set(w_qkv)
    slab = slab.at[R_BQKV:R_BQKV + 1, :].set(b_qkv)
    slab = slab.at[R_WO:R_WO + d_, :d_].set(wo)
    slab = slab.at[R_W1:R_W1 + d_, :D_FF].set(w1)
    slab = slab.at[R_B1:R_B1 + 1, :D_FF].set(b1)
    slab = slab.at[R_W2:R_W2 + D_FF, :d_].set(w2)
    slab = slab.at[R_VEC:R_VEC + 6, :d_].set(vec)

    x_flat = x.reshape(b_ * l_, d_)
    rows_blk = seqs_per_block * l_

    grid_spec = pltpu.PrefetchScalarGridSpec(
        num_scalar_prefetch=0,
        grid=(b_ // seqs_per_block,),
        in_specs=[pl.BlockSpec((rows_blk, d_), lambda i: (i, 0)),
                  pl.BlockSpec((P_ROWS, PCOLS), lambda i: (0, 0))],
        out_specs=pl.BlockSpec((rows_blk, d_), lambda i: (i, 0)),
    )
    out_flat = pl.pallas_call(
        encoder_layer_kernel,
        out_shape=jax.ShapeDtypeStruct((b_ * l_, d_), jnp.float32),
        grid_spec=grid_spec,
        compiler_params=pltpu.CompilerParams(dimension_semantics=("parallel",)),
    )(x_flat, slab)
    return out_flat.reshape(b_, l_, d_)


# ---------------- pure-JAX reference for validation ----------------
def reference(x, params):
    (wq, bq, wk, bk, wv, bv, wo, bo, g1, bt1, w1, b1, w2, b2, g2, bt2) = params
    pad = KSIZE // 2

    def conv(xb, w, b):
        xp = jnp.pad(xb, ((pad, pad), (0, 0)))
        out = jnp.zeros((L, D_MODEL), jnp.float32)
        for k in range(KSIZE):
            out = out + xp[k:k + L] @ w[k]
        return out + b

    def ln(z, g, bta):
        mu = z.mean(-1, keepdims=True)
        var = ((z - mu) ** 2).mean(-1, keepdims=True)
        return (z - mu) / jnp.sqrt(var + EPS) * g + bta

    outs = []
    for bi in range(x.shape[0]):
        xb = x[bi]
        q, kk, v = conv(xb, wq, bq), conv(xb, wk, bk), conv(xb, wv, bv)
        heads = []
        for h in range(N_HEADS):
            sl = slice(h * D_HEAD, (h + 1) * D_HEAD)
            s = q[:, sl] @ kk[:, sl].T / math.sqrt(D_HEAD)
            heads.append(jax.nn.softmax(s, axis=-1) @ v[:, sl])
        attn = jnp.concatenate(heads, axis=-1) @ wo + bo
        y = ln(xb + attn, g1, bt1)
        ff = jnp.maximum(y @ w1 + b1, 0.0) @ w2 + b2
        outs.append(ln(y + ff, g2, bt2))
    return jnp.stack(outs)


if __name__ == "__main__":
    key = jax.random.PRNGKey(0)
    ks = jax.random.split(key, 16)

    def init(k, shape, scale=0.1):
        return (scale * jax.random.normal(k, shape)).astype(jnp.float32)

    params = (
        init(ks[0], (KSIZE, D_MODEL, D_MODEL)),   # wq   (conv1d, 'same' padding)
        init(ks[1], (1, D_MODEL)),                # bq
        init(ks[2], (KSIZE, D_MODEL, D_MODEL)),   # wk
        init(ks[3], (1, D_MODEL)),                # bk
        init(ks[4], (KSIZE, D_MODEL, D_MODEL)),   # wv
        init(ks[5], (1, D_MODEL)),                # bv
        init(ks[6], (D_MODEL, D_MODEL)),          # wo   (output projection)
        init(ks[7], (1, D_MODEL)),                # bo
        jnp.ones((1, D_MODEL), jnp.float32),      # norm1 gamma
        jnp.zeros((1, D_MODEL), jnp.float32),     # norm1 beta
        init(ks[8], (D_MODEL, D_FF)),             # ff W1
        init(ks[9], (1, D_FF)),                   # ff b1
        init(ks[10], (D_FF, D_MODEL)),            # ff W2
        init(ks[11], (1, D_MODEL)),               # ff b2
        jnp.ones((1, D_MODEL), jnp.float32),      # norm2 gamma
        jnp.zeros((1, D_MODEL), jnp.float32),     # norm2 beta
    )

    x = jax.random.normal(ks[12], (B, L, D_MODEL), jnp.float32)

    out = encoder_layer(x, params)
    out = jax.block_until_ready(out)

    ref = reference(x, params)
    assert out.shape == (B, L, D_MODEL)
    assert bool(jnp.allclose(out, ref, rtol=1e-4, atol=1e-4)), "mismatch vs reference"

    print("KERNEL_OK")
</pallas_src>

<mosaic_0001>
module attributes {stable_mosaic.version = 11 : i64} {
  func.func @encoder_layer_kernel(%arg0: i32, %arg1: memref<16x32xf32, #tpu.memory_space<vmem>>, %arg2: memref<248x96xf32, #tpu.memory_space<vmem>>, %arg3: memref<16x32xf32, #tpu.memory_space<vmem>>) attributes {dimension_semantics = [#tpu.dimension_semantics<parallel>], iteration_bounds = array<i64: 1>, scalar_prefetch = 0 : i64, scratch_operands = 0 : i64, tpu.core_type = #tpu.core_type<tc>, window_params = [{transform_indices = @transform_0, window_bounds = array<i64: 16, 32>}, {pipeline_mode = #tpu.pipeline_mode<synchronous>, transform_indices = @transform_1, window_bounds = array<i64: 248, 96>}, {transform_indices = @transform_2, window_bounds = array<i64: 16, 32>}]} {
    %c0 = arith.constant 0 : index
    %c0_0 = arith.constant 0 : index
    %0 = vector.load %arg1[%c0, %c0_0] : memref<16x32xf32, #tpu.memory_space<vmem>>, vector<16x32xf32>
    %c0_1 = arith.constant 0 : index
    %c0_2 = arith.constant 0 : index
    %1 = vector.load %arg2[%c0_1, %c0_2] : memref<248x96xf32, #tpu.memory_space<vmem>>, vector<96x96xf32>
    %c96 = arith.constant 96 : index
    %c0_3 = arith.constant 0 : index
    %2 = vector.load %arg2[%c96, %c0_3] : memref<248x96xf32, #tpu.memory_space<vmem>>, vector<1x96xf32>
    %c104 = arith.constant 104 : index
    %c0_4 = arith.constant 0 : index
    %3 = vector.load %arg2[%c104, %c0_4] : memref<248x96xf32, #tpu.memory_space<vmem>>, vector<32x32xf32>
    %c136 = arith.constant 136 : index
    %c0_5 = arith.constant 0 : index
    %4 = vector.load %arg2[%c136, %c0_5] : memref<248x96xf32, #tpu.memory_space<vmem>>, vector<32x64xf32>
    %c168 = arith.constant 168 : index
    %c0_6 = arith.constant 0 : index
    %5 = vector.load %arg2[%c168, %c0_6] : memref<248x96xf32, #tpu.memory_space<vmem>>, vector<1x64xf32>
    %c176 = arith.constant 176 : index
    %c0_7 = arith.constant 0 : index
    %6 = vector.load %arg2[%c176, %c0_7] : memref<248x96xf32, #tpu.memory_space<vmem>>, vector<64x32xf32>
    %c240 = arith.constant 240 : index
    %c0_8 = arith.constant 0 : index
    %7 = vector.load %arg2[%c240, %c0_8] : memref<248x96xf32, #tpu.memory_space<vmem>>, vector<6x32xf32>
    %8 = vector.extract_strided_slice %7 {offsets = [0, 0], sizes = [1, 32], strides = [1, 1]} : vector<6x32xf32> to vector<1x32xf32>
    %9 = vector.extract_strided_slice %7 {offsets = [1, 0], sizes = [1, 32], strides = [1, 1]} : vector<6x32xf32> to vector<1x32xf32>
    %10 = vector.extract_strided_slice %7 {offsets = [2, 0], sizes = [1, 32], strides = [1, 1]} : vector<6x32xf32> to vector<1x32xf32>
    %11 = vector.extract_strided_slice %7 {offsets = [3, 0], sizes = [1, 32], strides = [1, 1]} : vector<6x32xf32> to vector<1x32xf32>
    %12 = vector.extract_strided_slice %7 {offsets = [4, 0], sizes = [1, 32], strides = [1, 1]} : vector<6x32xf32> to vector<1x32xf32>
    %13 = vector.extract_strided_slice %7 {offsets = [5, 0], sizes = [1, 32], strides = [1, 1]} : vector<6x32xf32> to vector<1x32xf32>
    %14 = tpu.iota {dimensions = array<i32: 0>} : vector<16x32xi32>
    %c8_i32 = arith.constant 8 : i32
    %15 = vector.broadcast %c8_i32 : i32 to vector<16x32xi32>
    %16 = arith.cmpi sge, %14, %15 : vector<16x32xi32>
    %c8_i32_9 = arith.constant 8 : i32
    %c0_i32 = arith.constant 0 : i32
    %17 = vector.broadcast %c8_i32_9 : i32 to vector<16x32xi32>
    %18 = vector.broadcast %c0_i32 : i32 to vector<16x32xi32>
    %19 = arith.select %16, %17, %18 : vector<16x32xi1>, vector<16x32xi32>
    %20 = arith.subi %14, %19 : vector<16x32xi32>
    %21 = vector.extract_strided_slice %0 {offsets = [15, 0], sizes = [1, 32], strides = [1, 1]} : vector<16x32xf32> to vector<1x32xf32>
    %22 = vector.extract_strided_slice %0 {offsets = [0, 0], sizes = [15, 32], strides = [1, 1]} : vector<16x32xf32> to vector<15x32xf32>
    %23 = tpu.concatenate %21, %22 in 0 : vector<1x32xf32>, vector<15x32xf32> -> vector<16x32xf32>
    %c1_i32 = arith.constant 1 : i32
    %24 = vector.broadcast %c1_i32 : i32 to vector<16x32xi32>
    %25 = arith.cmpi sge, %20, %24 : vector<16x32xi32>
    %cst = arith.constant 0.000000e+00 : f32
    %26 = vector.broadcast %cst : f32 to vector<16x32xf32>
    %27 = arith.select %25, %23, %26 : vector<16x32xi1>, vector<16x32xf32>
    %28 = vector.extract_strided_slice %0 {offsets = [1, 0], sizes = [15, 32], strides = [1, 1]} : vector<16x32xf32> to vector<15x32xf32>
    %29 = vector.extract_strided_slice %0 {offsets = [0, 0], sizes = [1, 32], strides = [1, 1]} : vector<16x32xf32> to vector<1x32xf32>
    %30 = tpu.concatenate %28, %29 in 0 : vector<15x32xf32>, vector<1x32xf32> -> vector<16x32xf32>
    %c7_i32 = arith.constant 7 : i32
    %31 = vector.broadcast %c7_i32 : i32 to vector<16x32xi32>
    %32 = arith.cmpi slt, %20, %31 : vector<16x32xi32>
    %cst_10 = arith.constant 0.000000e+00 : f32
    %33 = vector.broadcast %cst_10 : f32 to vector<16x32xf32>
    %34 = arith.select %32, %30, %33 : vector<16x32xi1>, vector<16x32xf32>
    %35 = tpu.concatenate %27, %0, %34 in 1 : vector<16x32xf32>, vector<16x32xf32>, vector<16x32xf32> -> vector<16x96xf32>
    %cst_11 = arith.constant dense<0.000000e+00> : vector<16x96xf32>
    %36 = tpu.matmul %35, %1, %cst_11 {dimension_numbers = #tpu.dot_dimension_numbers<[1], [0], [0], [1], [0, 0, 1, 1], [], []>} : vector<16x96xf32>, vector<96x96xf32>, vector<16x96xf32> -> vector<16x96xf32>
    %37 = vector.broadcast %2 : vector<1x96xf32> to vector<16x96xf32>
    %38 = arith.addf %36, %37 : vector<16x96xf32>
    %39 = vector.extract_strided_slice %38 {offsets = [0, 0], sizes = [16, 32], strides = [1, 1]} : vector<16x96xf32> to vector<16x32xf32>
    %40 = vector.shape_cast %39 : vector<16x32xf32> to vector<2x8x4x8xf32>
    %41 = tpu.transpose %40, [0, 2, 1, 3] : vector<2x8x4x8xf32> -> vector<2x4x8x8xf32>
    %42 = vector.shape_cast %41 : vector<2x4x8x8xf32> to vector<8x8x8xf32>
    %43 = vector.extract_strided_slice %38 {offsets = [0, 32], sizes = [16, 32], strides = [1, 1]} : vector<16x96xf32> to vector<16x32xf32>
    %44 = vector.shape_cast %43 : vector<16x32xf32> to vector<2x8x4x8xf32>
    %45 = tpu.transpose %44, [0, 2, 1, 3] : vector<2x8x4x8xf32> -> vector<2x4x8x8xf32>
    %46 = vector.shape_cast %45 : vector<2x4x8x8xf32> to vector<8x8x8xf32>
    %47 = vector.extract_strided_slice %38 {offsets = [0, 64], sizes = [16, 32], strides = [1, 1]} : vector<16x96xf32> to vector<16x32xf32>
    %48 = vector.shape_cast %47 : vector<16x32xf32> to vector<2x8x4x8xf32>
    %49 = tpu.transpose %48, [0, 2, 1, 3] : vector<2x8x4x8xf32> -> vector<2x4x8x8xf32>
    %50 = vector.shape_cast %49 : vector<2x4x8x8xf32> to vector<8x8x8xf32>
    "tpu.trace_start"() <{level = 10 : i32, message = "iqd,ikd->iqk"}> : () -> ()
    %cst_12 = arith.constant dense<0.000000e+00> : vector<8x8x8xf32>
    %51 = tpu.matmul %42, %46, %cst_12 {dimension_numbers = #tpu.dot_dimension_numbers<[2], [2], [1], [1], [0, 0, 0, 1, 1, 1], [0], [0]>} : vector<8x8x8xf32>, vector<8x8x8xf32>, vector<8x8x8xf32> -> vector<8x8x8xf32>
    "tpu.trace_stop"() : () -> ()
    %cst_13 = arith.constant dense<0xFF800000> : vector<8x8xf32>
    %52 = vector.multi_reduction <maximumf>, %51, %cst_13 [2] : vector<8x8x8xf32> to vector<8x8xf32>
    %53 = vector.shape_cast %52 : vector<8x8xf32> to vector<8x8x1xf32>
    %54 = vector.broadcast %53 : vector<8x8x1xf32> to vector<8x8x8xf32>
    %55 = arith.subf %51, %54 : vector<8x8x8xf32>
    %56 = math.exp %55 : vector<8x8x8xf32>
    %cst_14 = arith.constant dense<0.000000e+00> : vector<8x8xf32>
    %57 = vector.multi_reduction <add>, %56, %cst_14 [2] : vector<8x8x8xf32> to vector<8x8xf32>
    %58 = vector.shape_cast %57 : vector<8x8xf32> to vector<8x8x1xf32>
    %59 = vector.broadcast %58 : vector<8x8x1xf32> to vector<8x8x8xf32>
    %60 = arith.divf %56, %59 : vector<8x8x8xf32>
    "tpu.trace_start"() <{level = 10 : i32, message = "iqk,ikd->iqd"}> : () -> ()
    %cst_15 = arith.constant dense<0.000000e+00> : vector<8x8x8xf32>
    %61 = tpu.matmul %60, %50, %cst_15 {dimension_numbers = #tpu.dot_dimension_numbers<[2], [1], [1], [2], [0, 0, 0, 1, 1, 2], [0], [0]>} : vector<8x8x8xf32>, vector<8x8x8xf32>, vector<8x8x8xf32> -> vector<8x8x8xf32>
    "tpu.trace_stop"() : () -> ()
    %62 = vector.shape_cast %61 : vector<8x8x8xf32> to vector<2x4x8x8xf32>
    %63 = tpu.transpose %62, [0, 2, 1, 3] : vector<2x4x8x8xf32> -> vector<2x8x4x8xf32>
    %64 = vector.shape_cast %63 : vector<2x8x4x8xf32> to vector<16x32xf32>
    %cst_16 = arith.constant dense<0.000000e+00> : vector<16x32xf32>
    %65 = tpu.matmul %64, %3, %cst_16 {dimension_numbers = #tpu.dot_dimension_numbers<[1], [0], [0], [1], [0, 0, 1, 1], [], []>} : vector<16x32xf32>, vector<32x32xf32>, vector<16x32xf32> -> vector<16x32xf32>
    %66 = vector.broadcast %8 : vector<1x32xf32> to vector<16x32xf32>
    %67 = arith.addf %65, %66 : vector<16x32xf32>
    %68 = arith.addf %0, %67 : vector<16x32xf32>
    %cst_17 = arith.constant dense<0.000000e+00> : vector<16xf32>
    %69 = vector.multi_reduction <add>, %68, %cst_17 [1] : vector<16x32xf32> to vector<16xf32>
    %70 = vector.shape_cast %69 : vector<16xf32> to vector<16x1xf32>
    %cst_18 = arith.constant 3.200000e+01 : f32
    %71 = vector.broadcast %cst_18 : f32 to vector<16x1xf32>
    %72 = arith.divf %70, %71 : vector<16x1xf32>
    %73 = vector.broadcast %72 : vector<16x1xf32> to vector<16x32xf32>
    %74 = arith.subf %68, %73 : vector<16x32xf32>
    %75 = arith.mulf %74, %74 : vector<16x32xf32>
    %cst_19 = arith.constant dense<0.000000e+00> : vector<16xf32>
    %76 = vector.multi_reduction <add>, %75, %cst_19 [1] : vector<16x32xf32> to vector<16xf32>
    %77 = vector.shape_cast %76 : vector<16xf32> to vector<16x1xf32>
    %cst_20 = arith.constant 3.200000e+01 : f32
    %78 = vector.broadcast %cst_20 : f32 to vector<16x1xf32>
    %79 = arith.divf %77, %78 : vector<16x1xf32>
    %80 = vector.broadcast %72 : vector<16x1xf32> to vector<16x32xf32>
    %81 = arith.subf %68, %80 : vector<16x32xf32>
    %cst_21 = arith.constant 9.99999974E-6 : f32
    %82 = vector.broadcast %cst_21 : f32 to vector<16x1xf32>
    %83 = arith.addf %79, %82 : vector<16x1xf32>
    %84 = math.rsqrt %83 : vector<16x1xf32>
    %85 = vector.broadcast %84 : vector<16x1xf32> to vector<16x32xf32>
    %86 = arith.mulf %81, %85 : vector<16x32xf32>
    %87 = vector.broadcast %9 : vector<1x32xf32> to vector<16x32xf32>
    %88 = arith.mulf %86, %87 : vector<16x32xf32>
    %89 = vector.broadcast %10 : vector<1x32xf32> to vector<16x32xf32>
    %90 = arith.addf %88, %89 : vector<16x32xf32>
    %cst_22 = arith.constant dense<0.000000e+00> : vector<16x64xf32>
    %91 = tpu.matmul %90, %4, %cst_22 {dimension_numbers = #tpu.dot_dimension_numbers<[1], [0], [0], [1], [0, 0, 1, 1], [], []>} : vector<16x32xf32>, vector<32x64xf32>, vector<16x64xf32> -> vector<16x64xf32>
    %92 = vector.broadcast %5 : vector<1x64xf32> to vector<16x64xf32>
    %93 = arith.addf %91, %92 : vector<16x64xf32>
    %cst_23 = arith.constant 0.000000e+00 : f32
    %94 = vector.broadcast %cst_23 : f32 to vector<16x64xf32>
    %95 = arith.maximumf %93, %94 : vector<16x64xf32>
    %cst_24 = arith.constant dense<0.000000e+00> : vector<16x32xf32>
    %96 = tpu.matmul %95, %6, %cst_24 {dimension_numbers = #tpu.dot_dimension_numbers<[1], [0], [0], [1], [0, 0, 1, 1], [], []>} : vector<16x64xf32>, vector<64x32xf32>, vector<16x32xf32> -> vector<16x32xf32>
    %97 = vector.broadcast %11 : vector<1x32xf32> to vector<16x32xf32>
    %98 = arith.addf %96, %97 : vector<16x32xf32>
    %99 = arith.addf %90, %98 : vector<16x32xf32>
    %cst_25 = arith.constant dense<0.000000e+00> : vector<16xf32>
    %100 = vector.multi_reduction <add>, %99, %cst_25 [1] : vector<16x32xf32> to vector<16xf32>
    %101 = vector.shape_cast %100 : vector<16xf32> to vector<16x1xf32>
    %cst_26 = arith.constant 3.200000e+01 : f32
    %102 = vector.broadcast %cst_26 : f32 to vector<16x1xf32>
    %103 = arith.divf %101, %102 : vector<16x1xf32>
    %104 = vector.broadcast %103 : vector<16x1xf32> to vector<16x32xf32>
    %105 = arith.subf %99, %104 : vector<16x32xf32>
    %106 = arith.mulf %105, %105 : vector<16x32xf32>
    %cst_27 = arith.constant dense<0.000000e+00> : vector<16xf32>
    %107 = vector.multi_reduction <add>, %106, %cst_27 [1] : vector<16x32xf32> to vector<16xf32>
    %108 = vector.shape_cast %107 : vector<16xf32> to vector<16x1xf32>
    %cst_28 = arith.constant 3.200000e+01 : f32
    %109 = vector.broadcast %cst_28 : f32 to vector<16x1xf32>
    %110 = arith.divf %108, %109 : vector<16x1xf32>
    %111 = vector.broadcast %103 : vector<16x1xf32> to vector<16x32xf32>
    %112 = arith.subf %99, %111 : vector<16x32xf32>
    %cst_29 = arith.constant 9.99999974E-6 : f32
    %113 = vector.broadcast %cst_29 : f32 to vector<16x1xf32>
    %114 = arith.addf %110, %113 : vector<16x1xf32>
    %115 = math.rsqrt %114 : vector<16x1xf32>
    %116 = vector.broadcast %115 : vector<16x1xf32> to vector<16x32xf32>
    %117 = arith.mulf %112, %116 : vector<16x32xf32>
    %118 = vector.broadcast %12 : vector<1x32xf32> to vector<16x32xf32>
    %119 = arith.mulf %117, %118 : vector<16x32xf32>
    %120 = vector.broadcast %13 : vector<1x32xf32> to vector<16x32xf32>
    %121 = arith.addf %119, %120 : vector<16x32xf32>
    %c0_30 = arith.constant 0 : index
    %c0_31 = arith.constant 0 : index
    %122 = vector.load %arg3[%c0_30, %c0_31] : memref<16x32xf32, #tpu.memory_space<vmem>>, vector<16x32xf32>
    tpu.vector_store %arg3[%c0_30, %c0_31], %121 {strides = array<i32>} : memref<16x32xf32, #tpu.memory_space<vmem>>, vector<16x32xf32>,
    return
  }
  func.func @transform_0(%arg0: i32) -> (i32, i32) {
    %c0_i32 = arith.constant 0 : i32
    %c0_i32_0 = arith.constant 0 : i32
    return %arg0, %c0_i32 : i32, i32
  }
  func.func @transform_1(%arg0: i32) -> (i32, i32) {
    %c0_i32 = arith.constant 0 : i32
    %c0_i32_0 = arith.constant 0 : i32
    %c0_i32_1 = arith.constant 0 : i32
    return %c0_i32, %c0_i32_0 : i32, i32
  }
  func.func @transform_2(%arg0: i32) -> (i32, i32) {
    %c0_i32 = arith.constant 0 : i32
    %c0_i32_0 = arith.constant 0 : i32
    return %arg0, %c0_i32 : i32, i32
  }
}

</mosaic_0001>

<llo_original>
// kernel: tpu_custom_call.1
$region0: #{tpu_custom_call.1}
  #allocation0 [shape = 'u32[]', space=smem, size = 0x4, offset = 0x4, fixed_abs, tag = 'smem constant byte address 0x4 - core index']
  #allocation1 [shape = 'u32[144,128]{1,0:T(1,128)}', space=vmem, size = 0x12000, scoped, tag = 'internal scratch']
  %s0 = inlined_call_operand.vmem [shape: f32[16,32], index: 0, kind: input, shape index: {}]
  %s1 = inlined_call_operand.vmem [shape: f32[248,96], index: 1, kind: input, shape index: {}]
  %s2 = inlined_call_operand.hbm [shape: f32[16,32], index: 2, kind: output, shape index: {}]
  %s3 = sld [smem:[#allocation0]]
  $region18: #{tpu_custom_call.1} parent=0
    _
  %s5 = ssub.s32 1, %s3
  %s6 = scalar_select 0, %s5, %s3
  $region1: #{tpu_custom_call.1} parent=0
    #allocation2 [shape = 'u8[8192]{0}', space=vmem, size = 0x2000, scoped, tag = 'output window, operand 0, single buffered']
    #allocation3 [shape = 's32[1]{0}', space=sflag, size = 0x4, scoped, tag = 'scoped memory for tpu_custom_call.1']
    %7 = vsyncpa [#allocation3], 0
    // Predicated region
    $region2: #{tpu_custom_call.1} parent=1 // pred_check
      _
    $region3: #{tpu_custom_call.1} parent=1 // pred_check_branch
      %9 = sbr.rel (0) target = $region5
    $region4: #{tpu_custom_call.1} parent=1 // pred_region
      _
    $region5: #{tpu_custom_call.1} parent=1 // pred_fallthru
      _
    // Predicated region
    $region6: #{tpu_custom_call.1} parent=1 // pred_check
      _
    $region7: #{tpu_custom_call.1} parent=1 // pred_check_branch
      %11 = sbr.rel (0) target = $region9
    $region8: #{tpu_custom_call.1} parent=1 // pred_region
      _
    $region9: #{tpu_custom_call.1} parent=1 // pred_fallthru
      _
    %v12 = vld [vmem:[%s0] sm:$0xff]
    %v13 = vld [vmem:[%s0 + $0x8] sm:$0xff]
    %v14 = vld [vmem:[%s1] sm:$0xff]
    %v15 = vld [vmem:[%s1 + $0x8] sm:$0xff]
    %v16 = vld [vmem:[%s1 + $0x10] sm:$0xff]
    %v17 = vld [vmem:[%s1 + $0x18] sm:$0xff]
    %v18 = vld [vmem:[%s1 + $0x20] sm:$0xff]
    %v19 = vld [vmem:[%s1 + $0x28] sm:$0xff]
    %v20 = vld [vmem:[%s1 + $0x30] sm:$0xff]
    %v21 = vld [vmem:[%s1 + $0x38] sm:$0xff]
    %v22 = vld [vmem:[%s1 + $0x40] sm:$0xff]
    %v23 = vld [vmem:[%s1 + $0x48] sm:$0xff]
    %v24 = vld [vmem:[%s1 + $0x50] sm:$0xff]
    %v25 = vld [vmem:[%s1 + $0x58] sm:$0xff]
    %v26 = vld [vmem:[%s1 + $0x60] sm:$0x1]
    %v27 = vld [vmem:[%s1 + $0x68] sm:$0xff]
    %v28 = vld [vmem:[%s1 + $0x70] sm:$0xff]
    %v29 = vld [vmem:[%s1 + $0x78] sm:$0xff]
    %v30 = vld [vmem:[%s1 + $0x80] sm:$0xff]
    %v31 = vld [vmem:[%s1 + $0x88] sm:$0xff]
    %v32 = vld [vmem:[%s1 + $0x90] sm:$0xff]
    %v33 = vld [vmem:[%s1 + $0x98] sm:$0xff]
    %v34 = vld [vmem:[%s1 + $0xa0] sm:$0xff]
    %v35 = vld [vmem:[%s1 + $0xa8] sm:$0x1]
    %v36 = vld [vmem:[%s1 + $0xb0] sm:$0xff]
    %v37 = vld [vmem:[%s1 + $0xb8] sm:$0xff]
    %v38 = vld [vmem:[%s1 + $0xc0] sm:$0xff]
    %v39 = vld [vmem:[%s1 + $0xc8] sm:$0xff]
    %v40 = vld [vmem:[%s1 + $0xd0] sm:$0xff]
    %v41 = vld [vmem:[%s1 + $0xd8] sm:$0xff]
    %v42 = vld [vmem:[%s1 + $0xe0] sm:$0xff]
    %v43 = vld [vmem:[%s1 + $0xe8] sm:$0xff]
    %v44 = vld [vmem:[%s1 + $0xf0] sm:$0x3f]
    %v45 = vlaneseq
    %v46 = vshrl.u32 %v45, 7
    %v47 = vadd.s32 %v46, 8
    %vm48 = vcmp.ge.s32.totalorder %v46, 8
    %vm49 = vcmp.ge.s32.totalorder %v47, 8
    %v50 = vsel %vm48, 8, 0
    %v51 = vsel %vm49, 8, 0
    %v52 = vsub.s32 %v46, %v50
    %v53 = vsub.s32 %v47, %v51
    %v55 = vrot.slane %v13, 7
    %vm58 = vcmask 1040384
    %v59 = vrot.slane %v12, 7
    %v60 = vsel %vm58, %v59, %v55
    %v63 = vsel %vm58, %v55, %v59
    %vm64 = vcmp.ge.s32.totalorder %v52, 1
    %vm65 = vcmp.ge.s32.totalorder %v53, 1
    %v66 = vsel %vm64, %v63, 0.0
    %v67 = vsel %vm65, %v60, 0.0
    %vm68 = vcmask 1046528
    %v69 = vrot.slane %v12, 1
    %v70 = vrot.slane %v13, 1
    %v71 = vsel %vm68, %v69, %v70
    %v75 = vsel %vm68, %v70, %v69
    %vm76 = vcmp.lt.s32.totalorder %v52, 7
    %vm77 = vcmp.lt.s32.totalorder %v53, 7
    %v78 = vsel %vm76, %v71, 0.0
    %v79 = vsel %vm77, %v75, 0.0
    %80 = vrot.lane.b32.xlu0 %v12, 32
    %v81 = vpop.permute.xlu0 %80
    %82 = vrot.lane.b32.xlu0 %v13, 32
    %v83 = vpop.permute.xlu0 %82
    %88 = vrot.lane.b32.xlu0 %v78, 64
    %v89 = vpop.permute.xlu0 %88
    %90 = vrot.lane.b32.xlu0 %v79, 64
    %v91 = vpop.permute.xlu0 %90
    %vm94 = vcmask 261120
    %v95 = vsel %vm94, %v66, %v81
    %v96 = vsel %vm94, %v67, %v83
    %vm97 = vcmask 523264
    %v98 = vsel %vm97, %v95, %v89
    %v99 = vsel %vm97, %v96, %v91
    %v100 = vlaneseq
    %v101 = vshrl.u32 %v100, 7
    %v102 = vsub.s32 0, %v101
    %v103 = vrot.slane %v26, %v102
    %vm104 = vcmask 785408
    %v106 = vsel %vm104, %v98, 0
    %v109 = vsel %vm104, %v99, 0
    %111 = vmatprep.subr.mxu0 0.0
    %112 = vmatpush1.msra.mxu0 %v14
    %113 = vmatprep.subr.mxu0 0.0
    %114 = vmatpush1.msra.mxu0 %v15
    %115 = vmatprep.subr.mxu0 0.0
    %116 = vmatpush1.msra.mxu0 %v16
    %117 = vmatprep.subr.mxu0 0.0
    %118 = vmatpush1.msra.mxu0 %v17
    %119 = vmatprep.subr.mxu0 0.0
    %120 = vmatpush1.msra.mxu0 %v18
    %121 = vmatprep.subr.mxu0 0.0
    %122 = vmatpush1.msra.mxu0 %v19
    %123 = vmatprep.subr.mxu0 0.0
    %124 = vmatpush1.msra.mxu0 %v20
    %125 = vmatprep.subr.mxu0 0.0
    %126 = vmatpush1.msra.mxu0 %v21
    %127 = vmatprep.subr.mxu0 0.0
    %128 = vmatpush1.msra.mxu0 %v22
    %129 = vmatprep.subr.mxu0 0.0
    %130 = vmatpush1.msra.mxu0 %v23
    %131 = vmatprep.subr.mxu0 0.0
    %132 = vmatpush1.msra.mxu0 %v24
    %133 = vmatprep.subr.mxu0 0.0
    %134 = vmatpush1.msra.mxu0 %v25
    %135 = vmatprep.subr.mxu0 0.0
    %136 = vmatpush1.msra.mxu0 0.0
    %137 = vmatprep.subr.mxu0 0.0
    %138 = vmatpush1.msra.mxu0 0.0
    %139 = vmatprep.subr.mxu0 0.0
    %140 = vmatpush1.msra.mxu0 0.0
    %141 = vmatprep.subr.mxu0 0.0
    %142 = vmatpush1.msra.mxu0 0.0
    %143 = vmatprep.subr.mxu0 0.0
    %144 = vmatpush1.msra.mxu0 0.0
    %145 = vmatprep.subr.mxu0 0.0
    %146 = vmatpush1.msra.mxu0 0.0
    %147 = vmatprep.subr.mxu0 0.0
    %148 = vmatpush1.msra.mxu0 0.0
    %149 = vmatprep.subr.mxu0 0.0
    %150 = vmatpush1.msra.mxu0 0.0
    %151 = vmatprep.subr.mxu0 0.0
    %152 = vmatpush1.msra.mxu0 0.0
    %153 = vmatprep.subr.mxu0 0.0
    %154 = vmatpush1.msra.mxu0 0.0
    %155 = vmatprep.subr.mxu0 0.0
    %156 = vmatpush1.msra.mxu0 0.0
    %157 = vmatprep.subr.mxu0 0.0
    %158 = vmatpush1.msra.mxu0 0.0
    %159 = vmatprep.subr.mxu0 0.0
    %160 = vmatpush1.msra.mxu0 0.0
    %161 = vmatprep.subr.mxu0 0.0
    %162 = vmatpush1.msra.mxu0 0.0
    %163 = vmatprep.subr.mxu0 0.0
    %164 = vmatpush1.msra.mxu0 0.0
    %165 = vmatprep.subr.mxu0 0.0
    %166 = vmatpush1.msra.mxu0 0.0
    %167 = vmatprep.subr.mxu0 0.0
    %168 = vmatpush1.msra.mxu0 0.0
    %169 = vmatprep.subr.mxu0 0.0
    %170 = vmatpush1.msra.mxu0 0.0
    %171 = vmatprep.subr.mxu0 0.0
    %172 = vmatpush1.msra.mxu0 0.0
    %173 = vmatprep.subr.mxu0 0.0
    %174 = vmatpush1.msra.mxu0 0.0
    %175 = vmatprep.mubr.f32.mxu0 0.0
    %176 = vmatmul.mubr.f32.gmra.mrb[0].mxu0 %v106
    %v177 = vpop.f32.mrb[0].mxu0
    %v178 = vadd.f32 %v103, %v177
    %v179 = vpop.f32.mrb[0].mxu0
    %180 = vmatprep.mubr.f32.mxu0 0.0
    %181 = vmatmul.mubr.f32.gmra.mrb[0].mxu0 %v109
    %v182 = vpop.f32.mrb[0].mxu0
    %v183 = vadd.f32 %v103, %v182
    %v184 = vpop.f32.mrb[0].mxu0
    %185 = vdwg.mxu0
    %188 = vrot.lane.b32.xlu0 %v178, 120
    %v189 = vpop.permute.xlu0 %188
    %190 = vrot.lane.b32.xlu0 %v183, 120
    %v191 = vpop.permute.xlu0 %190
    %194 = vrot.lane.b32.xlu0 %v178, 112
    %v195 = vpop.permute.xlu0 %194
    %196 = vrot.lane.b32.xlu0 %v183, 112
    %v197 = vpop.permute.xlu0 %196
    %200 = vrot.lane.b32.xlu0 %v178, 104
    %v201 = vpop.permute.xlu0 %200
    %202 = vrot.lane.b32.xlu0 %v183, 104
    %v203 = vpop.permute.xlu0 %202
    %v206 = vcombine.low %v178, %v195
    %v207 = vcombine.high %v178, %v195
    %v209 = vunpack.c.l.s4 1983009808
    %v210 = vunpack.c.0.s8 %v209
    %v211 = vlaneseq
    %v212 = vshrl.u32 %v211, 7
    %v213 = vsub.s32 %v210, %v212
    %v214 = vrot.slane %v206, %v213
    %v216 = vunpack.c.l.s4 1983009808
    %v217 = vunpack.c.0.s8 %v216
    %v218 = vlaneseq
    %v219 = vshrl.u32 %v218, 7
    %v220 = vsub.s32 %v217, %v219
    %v221 = vrot.slane %v207, %v220
    %v222 = vcombine.low %v189, %v201
    %v223 = vcombine.high %v189, %v201
    %v225 = vunpack.c.l.s4 1983009808
    %v226 = vunpack.c.0.s8 %v225
    %v227 = vlaneseq
    %v228 = vshrl.u32 %v227, 7
    %v229 = vsub.s32 %v226, %v228
    %v230 = vrot.slane %v222, %v229
    %v232 = vunpack.c.l.s4 1983009808
    %v233 = vunpack.c.0.s8 %v232
    %v234 = vlaneseq
    %v235 = vshrl.u32 %v234, 7
    %v236 = vsub.s32 %v233, %v235
    %v237 = vrot.slane %v223, %v236
    %v238 = vcombine.low %v214, %v230
    %v239 = vcombine.high %v214, %v230
    %v241 = vunpack.c.l.s4 1934713408
    %v242 = vunpack.c.0.s8 %v241
    %v243 = vlaneseq
    %v244 = vshrl.u32 %v243, 7
    %v245 = vsub.s32 %v242, %v244
    %v246 = vrot.slane %v238, %v245
    %v248 = vunpack.c.l.s4 1934713408
    %v249 = vunpack.c.0.s8 %v248
    %v250 = vlaneseq
    %v251 = vshrl.u32 %v250, 7
    %v252 = vsub.s32 %v249, %v251
    %v253 = vrot.slane %v239, %v252
    %v254 = vcombine.low %v221, %v237
    %v255 = vcombine.high %v221, %v237
    %v257 = vunpack.c.l.s4 1934713408
    %v258 = vunpack.c.0.s8 %v257
    %v259 = vlaneseq
    %v260 = vshrl.u32 %v259, 7
    %v261 = vsub.s32 %v258, %v260
    %v262 = vrot.slane %v254, %v261
    %v264 = vunpack.c.l.s4 1934713408
    %v265 = vunpack.c.0.s8 %v264
    %v266 = vlaneseq
    %v267 = vshrl.u32 %v266, 7
    %v268 = vsub.s32 %v265, %v267
    %v269 = vrot.slane %v255, %v268
    %v270 = vcombine.high %v246, 0.0
    %v271 = vcombine.high %v253, 0.0
    %v272 = vcombine.high %v262, 0.0
    %v273 = vcombine.high %v269, 0.0
    %v274 = vcombine.low %v183, %v197
    %v275 = vcombine.high %v183, %v197
    %v277 = vunpack.c.l.s4 1983009808
    %v278 = vunpack.c.0.s8 %v277
    %v279 = vlaneseq
    %v280 = vshrl.u32 %v279, 7
    %v281 = vsub.s32 %v278, %v280
    %v282 = vrot.slane %v274, %v281
    %v284 = vunpack.c.l.s4 1983009808
    %v285 = vunpack.c.0.s8 %v284
    %v286 = vlaneseq
    %v287 = vshrl.u32 %v286, 7
    %v288 = vsub.s32 %v285, %v287
    %v289 = vrot.slane %v275, %v288
    %v290 = vcombine.low %v191, %v203
    %v291 = vcombine.high %v191, %v203
    %v293 = vunpack.c.l.s4 1983009808
    %v294 = vunpack.c.0.s8 %v293
    %v295 = vlaneseq
    %v296 = vshrl.u32 %v295, 7
    %v297 = vsub.s32 %v294, %v296
    %v298 = vrot.slane %v290, %v297
    %v300 = vunpack.c.l.s4 1983009808
    %v301 = vunpack.c.0.s8 %v300
    %v302 = vlaneseq
    %v303 = vshrl.u32 %v302, 7
    %v304 = vsub.s32 %v301, %v303
    %v305 = vrot.slane %v291, %v304
    %v306 = vcombine.low %v282, %v298
    %v307 = vcombine.high %v282, %v298
    %v309 = vunpack.c.l.s4 1934713408
    %v310 = vunpack.c.0.s8 %v309
    %v311 = vlaneseq
    %v312 = vshrl.u32 %v311, 7
    %v313 = vsub.s32 %v310, %v312
    %v314 = vrot.slane %v306, %v313
    %v316 = vunpack.c.l.s4 1934713408
    %v317 = vunpack.c.0.s8 %v316
    %v318 = vlaneseq
    %v319 = vshrl.u32 %v318, 7
    %v320 = vsub.s32 %v317, %v319
    %v321 = vrot.slane %v307, %v320
    %v322 = vcombine.low %v289, %v305
    %v323 = vcombine.high %v289, %v305
    %v325 = vunpack.c.l.s4 1934713408
    %v326 = vunpack.c.0.s8 %v325
    %v327 = vlaneseq
    %v328 = vshrl.u32 %v327, 7
    %v329 = vsub.s32 %v326, %v328
    %v330 = vrot.slane %v322, %v329
    %v332 = vunpack.c.l.s4 1934713408
    %v333 = vunpack.c.0.s8 %v332
    %v334 = vlaneseq
    %v335 = vshrl.u32 %v334, 7
    %v336 = vsub.s32 %v333, %v335
    %v337 = vrot.slane %v323, %v336
    %v338 = vcombine.high %v314, 0.0
    %v339 = vcombine.high %v321, 0.0
    %v340 = vcombine.high %v330, 0.0
    %v341 = vcombine.high %v337, 0.0
    %v342 = vcombine.low %v246, %v253
    %v344 = vunpack.c.l.s4 1983009808
    %v345 = vunpack.c.0.s8 %v344
    %v346 = vlaneseq
    %v347 = vshrl.u32 %v346, 7
    %v348 = vsub.s32 %v345, %v347
    %v349 = vrot.slane %v342, %v348
    %v350 = vcombine.low %v270, %v271
    %v352 = vunpack.c.l.s4 1983009808
    %v353 = vunpack.c.0.s8 %v352
    %v354 = vlaneseq
    %v355 = vshrl.u32 %v354, 7
    %v356 = vsub.s32 %v353, %v355
    %v357 = vrot.slane %v350, %v356
    %v358 = vcombine.low %v262, %v269
    %v360 = vunpack.c.l.s4 1983009808
    %v361 = vunpack.c.0.s8 %v360
    %v362 = vlaneseq
    %v363 = vshrl.u32 %v362, 7
    %v364 = vsub.s32 %v361, %v363
    %v365 = vrot.slane %v358, %v364
    %v366 = vcombine.low %v272, %v273
    %v368 = vunpack.c.l.s4 1983009808
    %v369 = vunpack.c.0.s8 %v368
    %v370 = vlaneseq
    %v371 = vshrl.u32 %v370, 7
    %v372 = vsub.s32 %v369, %v371
    %v373 = vrot.slane %v366, %v372
    %v374 = vcombine.low %v349, %v357
    %v375 = vcombine.high %v349, %v357
    %v377 = vunpack.c.l.s4 1934713408
    %v378 = vunpack.c.0.s8 %v377
    %v379 = vlaneseq
    %v380 = vshrl.u32 %v379, 7
    %v381 = vsub.s32 %v378, %v380
    %v382 = vrot.slane %v374, %v381
    %v384 = vunpack.c.l.s4 1934713408
    %v385 = vunpack.c.0.s8 %v384
    %v386 = vlaneseq
    %v387 = vshrl.u32 %v386, 7
    %v388 = vsub.s32 %v385, %v387
    %v389 = vrot.slane %v375, %v388
    %v390 = vcombine.low %v365, %v373
    %v391 = vcombine.high %v365, %v373
    %v393 = vunpack.c.l.s4 1934713408
    %v394 = vunpack.c.0.s8 %v393
    %v395 = vlaneseq
    %v396 = vshrl.u32 %v395, 7
    %v397 = vsub.s32 %v394, %v396
    %v398 = vrot.slane %v390, %v397
    %v400 = vunpack.c.l.s4 1934713408
    %v401 = vunpack.c.0.s8 %v400
    %v402 = vlaneseq
    %v403 = vshrl.u32 %v402, 7
    %v404 = vsub.s32 %v401, %v403
    %v405 = vrot.slane %v391, %v404
    %v406 = vcombine.low %v382, %v398
    %v407 = vcombine.high %v382, %v398
    %v408 = vcombine.low %v389, %v405
    %v409 = vcombine.high %v389, %v405
    %v410 = vcombine.low %v314, %v321
    %v412 = vunpack.c.l.s4 1983009808
    %v413 = vunpack.c.0.s8 %v412
    %v414 = vlaneseq
    %v415 = vshrl.u32 %v414, 7
    %v416 = vsub.s32 %v413, %v415
    %v417 = vrot.slane %v410, %v416
    %v418 = vcombine.low %v338, %v339
    %v420 = vunpack.c.l.s4 1983009808
    %v421 = vunpack.c.0.s8 %v420
    %v422 = vlaneseq
    %v423 = vshrl.u32 %v422, 7
    %v424 = vsub.s32 %v421, %v423
    %v425 = vrot.slane %v418, %v424
    %v426 = vcombine.low %v330, %v337
    %v428 = vunpack.c.l.s4 1983009808
    %v429 = vunpack.c.0.s8 %v428
    %v430 = vlaneseq
    %v431 = vshrl.u32 %v430, 7
    %v432 = vsub.s32 %v429, %v431
    %v433 = vrot.slane %v426, %v432
    %v434 = vcombine.low %v340, %v341
    %v436 = vunpack.c.l.s4 1983009808
    %v437 = vunpack.c.0.s8 %v436
    %v438 = vlaneseq
    %v439 = vshrl.u32 %v438, 7
    %v440 = vsub.s32 %v437, %v439
    %v441 = vrot.slane %v434, %v440
    %v442 = vcombine.low %v417, %v425
    %v443 = vcombine.high %v417, %v425
    %v445 = vunpack.c.l.s4 1934713408
    %v446 = vunpack.c.0.s8 %v445
    %v447 = vlaneseq
    %v448 = vshrl.u32 %v447, 7
    %v449 = vsub.s32 %v446, %v448
    %v450 = vrot.slane %v442, %v449
    %v452 = vunpack.c.l.s4 1934713408
    %v453 = vunpack.c.0.s8 %v452
    %v454 = vlaneseq
    %v455 = vshrl.u32 %v454, 7
    %v456 = vsub.s32 %v453, %v455
    %v457 = vrot.slane %v443, %v456
    %v458 = vcombine.low %v433, %v441
    %v459 = vcombine.high %v433, %v441
    %v461 = vunpack.c.l.s4 1934713408
    %v462 = vunpack.c.0.s8 %v461
    %v463 = vlaneseq
    %v464 = vshrl.u32 %v463, 7
    %v465 = vsub.s32 %v462, %v464
    %v466 = vrot.slane %v458, %v465
    %v468 = vunpack.c.l.s4 1934713408
    %v469 = vunpack.c.0.s8 %v468
    %v470 = vlaneseq
    %v471 = vshrl.u32 %v470, 7
    %v472 = vsub.s32 %v469, %v471
    %v473 = vrot.slane %v459, %v472
    %v474 = vcombine.low %v450, %v466
    %v475 = vcombine.high %v450, %v466
    %v476 = vcombine.low %v457, %v473
    %v477 = vcombine.high %v457, %v473
    %478 = vrot.lane.b32.xlu0 %v178, 96
    %v479 = vpop.permute.xlu0 %478
    %480 = vrot.lane.b32.xlu0 %v183, 96
    %v481 = vpop.permute.xlu0 %480
    %482 = vrot.lane.b32.xlu0 %v189, 96
    %v483 = vpop.permute.xlu0 %482
    %484 = vrot.lane.b32.xlu0 %v191, 96
    %v485 = vpop.permute.xlu0 %484
    %486 = vrot.lane.b32.xlu0 %v195, 96
    %v487 = vpop.permute.xlu0 %486
    %488 = vrot.lane.b32.xlu0 %v197, 96
    %v489 = vpop.permute.xlu0 %488
    %490 = vrot.lane.b32.xlu0 %v201, 96
    %v491 = vpop.permute.xlu0 %490
    %492 = vrot.lane.b32.xlu0 %v203, 96
    %v493 = vpop.permute.xlu0 %492
    %v502 = vcombine.low %v479, %v487
    %v503 = vcombine.high %v479, %v487
    %v505 = vunpack.c.l.s4 1983009808
    %v506 = vunpack.c.0.s8 %v505
    %v507 = vlaneseq
    %v508 = vshrl.u32 %v507, 7
    %v509 = vsub.s32 %v506, %v508
    %v510 = vrot.slane %v502, %v509
    %v512 = vunpack.c.l.s4 1983009808
    %v513 = vunpack.c.0.s8 %v512
    %v514 = vlaneseq
    %v515 = vshrl.u32 %v514, 7
    %v516 = vsub.s32 %v513, %v515
    %v517 = vrot.slane %v503, %v516
    %v518 = vcombine.low %v483, %v491
    %v519 = vcombine.high %v483, %v491
    %v521 = vunpack.c.l.s4 1983009808
    %v522 = vunpack.c.0.s8 %v521
    %v523 = vlaneseq
    %v524 = vshrl.u32 %v523, 7
    %v525 = vsub.s32 %v522, %v524
    %v526 = vrot.slane %v518, %v525
    %v528 = vunpack.c.l.s4 1983009808
    %v529 = vunpack.c.0.s8 %v528
    %v530 = vlaneseq
    %v531 = vshrl.u32 %v530, 7
    %v532 = vsub.s32 %v529, %v531
    %v533 = vrot.slane %v519, %v532
    %v534 = vcombine.low %v510, %v526
    %v535 = vcombine.high %v510, %v526
    %v537 = vunpack.c.l.s4 1934713408
    %v538 = vunpack.c.0.s8 %v537
    %v539 = vlaneseq
    %v540 = vshrl.u32 %v539, 7
    %v541 = vsub.s32 %v538, %v540
    %v542 = vrot.slane %v534, %v541
    %v544 = vunpack.c.l.s4 1934713408
    %v545 = vunpack.c.0.s8 %v544
    %v546 = vlaneseq
    %v547 = vshrl.u32 %v546, 7
    %v548 = vsub.s32 %v545, %v547
    %v549 = vrot.slane %v535, %v548
    %v550 = vcombine.low %v517, %v533
    %v551 = vcombine.high %v517, %v533
    %v553 = vunpack.c.l.s4 1934713408
    %v554 = vunpack.c.0.s8 %v553
    %v555 = vlaneseq
    %v556 = vshrl.u32 %v555, 7
    %v557 = vsub.s32 %v554, %v556
    %v558 = vrot.slane %v550, %v557
    %v560 = vunpack.c.l.s4 1934713408
    %v561 = vunpack.c.0.s8 %v560
    %v562 = vlaneseq
    %v563 = vshrl.u32 %v562, 7
    %v564 = vsub.s32 %v561, %v563
    %v565 = vrot.slane %v551, %v564
    %v566 = vcombine.high %v542, 0.0
    %v567 = vcombine.high %v549, 0.0
    %v568 = vcombine.high %v558, 0.0
    %v569 = vcombine.high %v565, 0.0
    %v570 = vcombine.low %v481, %v489
    %v571 = vcombine.high %v481, %v489
    %v573 = vunpack.c.l.s4 1983009808
    %v574 = vunpack.c.0.s8 %v573
    %v575 = vlaneseq
    %v576 = vshrl.u32 %v575, 7
    %v577 = vsub.s32 %v574, %v576
    %v578 = vrot.slane %v570, %v577
    %v580 = vunpack.c.l.s4 1983009808
    %v581 = vunpack.c.0.s8 %v580
    %v582 = vlaneseq
    %v583 = vshrl.u32 %v582, 7
    %v584 = vsub.s32 %v581, %v583
    %v585 = vrot.slane %v571, %v584
    %v586 = vcombine.low %v485, %v493
    %v587 = vcombine.high %v485, %v493
    %v589 = vunpack.c.l.s4 1983009808
    %v590 = vunpack.c.0.s8 %v589
    %v591 = vlaneseq
    %v592 = vshrl.u32 %v591, 7
    %v593 = vsub.s32 %v590, %v592
    %v594 = vrot.slane %v586, %v593
    %v596 = vunpack.c.l.s4 1983009808
    %v597 = vunpack.c.0.s8 %v596
    %v598 = vlaneseq
    %v599 = vshrl.u32 %v598, 7
    %v600 = vsub.s32 %v597, %v599
    %v601 = vrot.slane %v587, %v600
    %v602 = vcombine.low %v578, %v594
    %v603 = vcombine.high %v578, %v594
    %v605 = vunpack.c.l.s4 1934713408
    %v606 = vunpack.c.0.s8 %v605
    %v607 = vlaneseq
    %v608 = vshrl.u32 %v607, 7
    %v609 = vsub.s32 %v606, %v608
    %v610 = vrot.slane %v602, %v609
    %v612 = vunpack.c.l.s4 1934713408
    %v613 = vunpack.c.0.s8 %v612
    %v614 = vlaneseq
    %v615 = vshrl.u32 %v614, 7
    %v616 = vsub.s32 %v613, %v615
    %v617 = vrot.slane %v603, %v616
    %v618 = vcombine.low %v585, %v601
    %v619 = vcombine.high %v585, %v601
    %v621 = vunpack.c.l.s4 1934713408
    %v622 = vunpack.c.0.s8 %v621
    %v623 = vlaneseq
    %v624 = vshrl.u32 %v623, 7
    %v625 = vsub.s32 %v622, %v624
    %v626 = vrot.slane %v618, %v625
    %v628 = vunpack.c.l.s4 1934713408
    %v629 = vunpack.c.0.s8 %v628
    %v630 = vlaneseq
    %v631 = vshrl.u32 %v630, 7
    %v632 = vsub.s32 %v629, %v631
    %v633 = vrot.slane %v619, %v632
    %v634 = vcombine.high %v610, 0.0
    %v635 = vcombine.high %v617, 0.0
    %v636 = vcombine.high %v626, 0.0
    %v637 = vcombine.high %v633, 0.0
    %v638 = vcombine.low %v542, %v549
    %v640 = vunpack.c.l.s4 1983009808
    %v641 = vunpack.c.0.s8 %v640
    %v642 = vlaneseq
    %v643 = vshrl.u32 %v642, 7
    %v644 = vsub.s32 %v641, %v643
    %v645 = vrot.slane %v638, %v644
    %v646 = vcombine.low %v566, %v567
    %v648 = vunpack.c.l.s4 1983009808
    %v649 = vunpack.c.0.s8 %v648
    %v650 = vlaneseq
    %v651 = vshrl.u32 %v650, 7
    %v652 = vsub.s32 %v649, %v651
    %v653 = vrot.slane %v646, %v652
    %v654 = vcombine.low %v558, %v565
    %v656 = vunpack.c.l.s4 1983009808
    %v657 = vunpack.c.0.s8 %v656
    %v658 = vlaneseq
    %v659 = vshrl.u32 %v658, 7
    %v660 = vsub.s32 %v657, %v659
    %v661 = vrot.slane %v654, %v660
    %v662 = vcombine.low %v568, %v569
    %v664 = vunpack.c.l.s4 1983009808
    %v665 = vunpack.c.0.s8 %v664
    %v666 = vlaneseq
    %v667 = vshrl.u32 %v666, 7
    %v668 = vsub.s32 %v665, %v667
    %v669 = vrot.slane %v662, %v668
    %v670 = vcombine.low %v645, %v653
    %v671 = vcombine.high %v645, %v653
    %v673 = vunpack.c.l.s4 1934713408
    %v674 = vunpack.c.0.s8 %v673
    %v675 = vlaneseq
    %v676 = vshrl.u32 %v675, 7
    %v677 = vsub.s32 %v674, %v676
    %v678 = vrot.slane %v670, %v677
    %v680 = vunpack.c.l.s4 1934713408
    %v681 = vunpack.c.0.s8 %v680
    %v682 = vlaneseq
    %v683 = vshrl.u32 %v682, 7
    %v684 = vsub.s32 %v681, %v683
    %v685 = vrot.slane %v671, %v684
    %v686 = vcombine.low %v661, %v669
    %v687 = vcombine.high %v661, %v669
    %v689 = vunpack.c.l.s4 1934713408
    %v690 = vunpack.c.0.s8 %v689
    %v691 = vlaneseq
    %v692 = vshrl.u32 %v691, 7
    %v693 = vsub.s32 %v690, %v692
    %v694 = vrot.slane %v686, %v693
    %v696 = vunpack.c.l.s4 1934713408
    %v697 = vunpack.c.0.s8 %v696
    %v698 = vlaneseq
    %v699 = vshrl.u32 %v698, 7
    %v700 = vsub.s32 %v697, %v699
    %v701 = vrot.slane %v687, %v700
    %v702 = vcombine.low %v678, %v694
    %v703 = vcombine.high %v678, %v694
    %v704 = vcombine.low %v685, %v701
    %v705 = vcombine.high %v685, %v701
    %v706 = vcombine.low %v610, %v617
    %v708 = vunpack.c.l.s4 1983009808
    %v709 = vunpack.c.0.s8 %v708
    %v710 = vlaneseq
    %v711 = vshrl.u32 %v710, 7
    %v712 = vsub.s32 %v709, %v711
    %v713 = vrot.slane %v706, %v712
    %v714 = vcombine.low %v634, %v635
    %v716 = vunpack.c.l.s4 1983009808
    %v717 = vunpack.c.0.s8 %v716
    %v718 = vlaneseq
    %v719 = vshrl.u32 %v718, 7
    %v720 = vsub.s32 %v717, %v719
    %v721 = vrot.slane %v714, %v720
    %v722 = vcombine.low %v626, %v633
    %v724 = vunpack.c.l.s4 1983009808
    %v725 = vunpack.c.0.s8 %v724
    %v726 = vlaneseq
    %v727 = vshrl.u32 %v726, 7
    %v728 = vsub.s32 %v725, %v727
    %v729 = vrot.slane %v722, %v728
    %v730 = vcombine.low %v636, %v637
    %v732 = vunpack.c.l.s4 1983009808
    %v733 = vunpack.c.0.s8 %v732
    %v734 = vlaneseq
    %v735 = vshrl.u32 %v734, 7
    %v736 = vsub.s32 %v733, %v735
    %v737 = vrot.slane %v730, %v736
    %v738 = vcombine.low %v713, %v721
    %v739 = vcombine.high %v713, %v721
    %v741 = vunpack.c.l.s4 1934713408
    %v742 = vunpack.c.0.s8 %v741
    %v743 = vlaneseq
    %v744 = vshrl.u32 %v743, 7
    %v745 = vsub.s32 %v742, %v744
    %v746 = vrot.slane %v738, %v745
    %v748 = vunpack.c.l.s4 1934713408
    %v749 = vunpack.c.0.s8 %v748
    %v750 = vlaneseq
    %v751 = vshrl.u32 %v750, 7
    %v752 = vsub.s32 %v749, %v751
    %v753 = vrot.slane %v739, %v752
    %v754 = vcombine.low %v729, %v737
    %v755 = vcombine.high %v729, %v737
    %v757 = vunpack.c.l.s4 1934713408
    %v758 = vunpack.c.0.s8 %v757
    %v759 = vlaneseq
    %v760 = vshrl.u32 %v759, 7
    %v761 = vsub.s32 %v758, %v760
    %v762 = vrot.slane %v754, %v761
    %v764 = vunpack.c.l.s4 1934713408
    %v765 = vunpack.c.0.s8 %v764
    %v766 = vlaneseq
    %v767 = vshrl.u32 %v766, 7
    %v768 = vsub.s32 %v765, %v767
    %v769 = vrot.slane %v755, %v768
    %v770 = vcombine.low %v746, %v762
    %v771 = vcombine.high %v746, %v762
    %v772 = vcombine.low %v753, %v769
    %v773 = vcombine.high %v753, %v769
    %774 = vrot.lane.b32.xlu0 %v178, 64
    %v775 = vpop.permute.xlu0 %774
    %776 = vrot.lane.b32.xlu0 %v183, 64
    %v777 = vpop.permute.xlu0 %776
    %778 = vrot.lane.b32.xlu0 %v189, 64
    %v779 = vpop.permute.xlu0 %778
    %780 = vrot.lane.b32.xlu0 %v191, 64
    %v781 = vpop.permute.xlu0 %780
    %782 = vrot.lane.b32.xlu0 %v195, 64
    %v783 = vpop.permute.xlu0 %782
    %784 = vrot.lane.b32.xlu0 %v197, 64
    %v785 = vpop.permute.xlu0 %784
    %786 = vrot.lane.b32.xlu0 %v201, 64
    %v787 = vpop.permute.xlu0 %786
    %788 = vrot.lane.b32.xlu0 %v203, 64
    %v789 = vpop.permute.xlu0 %788
    %v798 = vcombine.low %v775, %v783
    %v799 = vcombine.high %v775, %v783
    %v801 = vunpack.c.l.s4 1983009808
    %v802 = vunpack.c.0.s8 %v801
    %v803 = vlaneseq
    %v804 = vshrl.u32 %v803, 7
    %v805 = vsub.s32 %v802, %v804
    %v806 = vrot.slane %v798, %v805
    %v808 = vunpack.c.l.s4 1983009808
    %v809 = vunpack.c.0.s8 %v808
    %v810 = vlaneseq
    %v811 = vshrl.u32 %v810, 7
    %v812 = vsub.s32 %v809, %v811
    %v813 = vrot.slane %v799, %v812
    %v814 = vcombine.low %v779, %v787
    %v815 = vcombine.high %v779, %v787
    %v817 = vunpack.c.l.s4 1983009808
    %v818 = vunpack.c.0.s8 %v817
    %v819 = vlaneseq
    %v820 = vshrl.u32 %v819, 7
    %v821 = vsub.s32 %v818, %v820
    %v822 = vrot.slane %v814, %v821
    %v824 = vunpack.c.l.s4 1983009808
    %v825 = vunpack.c.0.s8 %v824
    %v826 = vlaneseq
    %v827 = vshrl.u32 %v826, 7
    %v828 = vsub.s32 %v825, %v827
    %v829 = vrot.slane %v815, %v828
    %v830 = vcombine.low %v806, %v822
    %v831 = vcombine.high %v806, %v822
    %v833 = vunpack.c.l.s4 1934713408
    %v834 = vunpack.c.0.s8 %v833
    %v835 = vlaneseq
    %v836 = vshrl.u32 %v835, 7
    %v837 = vsub.s32 %v834, %v836
    %v838 = vrot.slane %v830, %v837
    %v840 = vunpack.c.l.s4 1934713408
    %v841 = vunpack.c.0.s8 %v840
    %v842 = vlaneseq
    %v843 = vshrl.u32 %v842, 7
    %v844 = vsub.s32 %v841, %v843
    %v845 = vrot.slane %v831, %v844
    %v846 = vcombine.low %v813, %v829
    %v847 = vcombine.high %v813, %v829
    %v849 = vunpack.c.l.s4 1934713408
    %v850 = vunpack.c.0.s8 %v849
    %v851 = vlaneseq
    %v852 = vshrl.u32 %v851, 7
    %v853 = vsub.s32 %v850, %v852
    %v854 = vrot.slane %v846, %v853
    %v856 = vunpack.c.l.s4 1934713408
    %v857 = vunpack.c.0.s8 %v856
    %v858 = vlaneseq
    %v859 = vshrl.u32 %v858, 7
    %v860 = vsub.s32 %v857, %v859
    %v861 = vrot.slane %v847, %v860
    %v862 = vcombine.high %v838, 0.0
    %v863 = vcombine.high %v845, 0.0
    %v864 = vcombine.high %v854, 0.0
    %v865 = vcombine.high %v861, 0.0
    %v866 = vcombine.low %v777, %v785
    %v867 = vcombine.high %v777, %v785
    %v869 = vunpack.c.l.s4 1983009808
    %v870 = vunpack.c.0.s8 %v869
    %v871 = vlaneseq
    %v872 = vshrl.u32 %v871, 7
    %v873 = vsub.s32 %v870, %v872
    %v874 = vrot.slane %v866, %v873
    %v876 = vunpack.c.l.s4 1983009808
    %v877 = vunpack.c.0.s8 %v876
    %v878 = vlaneseq
    %v879 = vshrl.u32 %v878, 7
    %v880 = vsub.s32 %v877, %v879
    %v881 = vrot.slane %v867, %v880
    %v882 = vcombine.low %v781, %v789
    %v883 = vcombine.high %v781, %v789
    %v885 = vunpack.c.l.s4 1983009808
    %v886 = vunpack.c.0.s8 %v885
    %v887 = vlaneseq
    %v888 = vshrl.u32 %v887, 7
    %v889 = vsub.s32 %v886, %v888
    %v890 = vrot.slane %v882, %v889
    %v892 = vunpack.c.l.s4 1983009808
    %v893 = vunpack.c.0.s8 %v892
    %v894 = vlaneseq
    %v895 = vshrl.u32 %v894, 7
    %v896 = vsub.s32 %v893, %v895
    %v897 = vrot.slane %v883, %v896
    %v898 = vcombine.low %v874, %v890
    %v899 = vcombine.high %v874, %v890
    %v901 = vunpack.c.l.s4 1934713408
    %v902 = vunpack.c.0.s8 %v901
    %v903 = vlaneseq
    %v904 = vshrl.u32 %v903, 7
    %v905 = vsub.s32 %v902, %v904
    %v906 = vrot.slane %v898, %v905
    %v908 = vunpack.c.l.s4 1934713408
    %v909 = vunpack.c.0.s8 %v908
    %v910 = vlaneseq
    %v911 = vshrl.u32 %v910, 7
    %v912 = vsub.s32 %v909, %v911
    %v913 = vrot.slane %v899, %v912
    %v914 = vcombine.low %v881, %v897
    %v915 = vcombine.high %v881, %v897
    %v917 = vunpack.c.l.s4 1934713408
    %v918 = vunpack.c.0.s8 %v917
    %v919 = vlaneseq
    %v920 = vshrl.u32 %v919, 7
    %v921 = vsub.s32 %v918, %v920
    %v922 = vrot.slane %v914, %v921
    %v924 = vunpack.c.l.s4 1934713408
    %v925 = vunpack.c.0.s8 %v924
    %v926 = vlaneseq
    %v927 = vshrl.u32 %v926, 7
    %v928 = vsub.s32 %v925, %v927
    %v929 = vrot.slane %v915, %v928
    %v930 = vcombine.high %v906, 0.0
    %v931 = vcombine.high %v913, 0.0
    %v932 = vcombine.high %v922, 0.0
    %v933 = vcombine.high %v929, 0.0
    %v934 = vcombine.low %v838, %v845
    %v936 = vunpack.c.l.s4 1983009808
    %v937 = vunpack.c.0.s8 %v936
    %v938 = vlaneseq
    %v939 = vshrl.u32 %v938, 7
    %v940 = vsub.s32 %v937, %v939
    %v941 = vrot.slane %v934, %v940
    %v942 = vcombine.low %v862, %v863
    %v944 = vunpack.c.l.s4 1983009808
    %v945 = vunpack.c.0.s8 %v944
    %v946 = vlaneseq
    %v947 = vshrl.u32 %v946, 7
    %v948 = vsub.s32 %v945, %v947
    %v949 = vrot.slane %v942, %v948
    %v950 = vcombine.low %v854, %v861
    %v952 = vunpack.c.l.s4 1983009808
    %v953 = vunpack.c.0.s8 %v952
    %v954 = vlaneseq
    %v955 = vshrl.u32 %v954, 7
    %v956 = vsub.s32 %v953, %v955
    %v957 = vrot.slane %v950, %v956
    %v958 = vcombine.low %v864, %v865
    %v960 = vunpack.c.l.s4 1983009808
    %v961 = vunpack.c.0.s8 %v960
    %v962 = vlaneseq
    %v963 = vshrl.u32 %v962, 7
    %v964 = vsub.s32 %v961, %v963
    %v965 = vrot.slane %v958, %v964
    %v966 = vcombine.low %v941, %v949
    %v967 = vcombine.high %v941, %v949
    %v969 = vunpack.c.l.s4 1934713408
    %v970 = vunpack.c.0.s8 %v969
    %v971 = vlaneseq
    %v972 = vshrl.u32 %v971, 7
    %v973 = vsub.s32 %v970, %v972
    %v974 = vrot.slane %v966, %v973
    %v976 = vunpack.c.l.s4 1934713408
    %v977 = vunpack.c.0.s8 %v976
    %v978 = vlaneseq
    %v979 = vshrl.u32 %v978, 7
    %v980 = vsub.s32 %v977, %v979
    %v981 = vrot.slane %v967, %v980
    %v982 = vcombine.low %v957, %v965
    %v983 = vcombine.high %v957, %v965
    %v985 = vunpack.c.l.s4 1934713408
    %v986 = vunpack.c.0.s8 %v985
    %v987 = vlaneseq
    %v988 = vshrl.u32 %v987, 7
    %v989 = vsub.s32 %v986, %v988
    %v990 = vrot.slane %v982, %v989
    %v992 = vunpack.c.l.s4 1934713408
    %v993 = vunpack.c.0.s8 %v992
    %v994 = vlaneseq
    %v995 = vshrl.u32 %v994, 7
    %v996 = vsub.s32 %v993, %v995
    %v997 = vrot.slane %v983, %v996
    %v998 = vcombine.low %v974, %v990
    %v999 = vcombine.high %v974, %v990
    %v1000 = vcombine.low %v981, %v997
    %v1001 = vcombine.high %v981, %v997
    %v1002 = vcombine.low %v906, %v913
    %v1004 = vunpack.c.l.s4 1983009808
    %v1005 = vunpack.c.0.s8 %v1004
    %v1006 = vlaneseq
    %v1007 = vshrl.u32 %v1006, 7
    %v1008 = vsub.s32 %v1005, %v1007
    %v1009 = vrot.slane %v1002, %v1008
    %v1010 = vcombine.low %v930, %v931
    %v1012 = vunpack.c.l.s4 1983009808
    %v1013 = vunpack.c.0.s8 %v1012
    %v1014 = vlaneseq
    %v1015 = vshrl.u32 %v1014, 7
    %v1016 = vsub.s32 %v1013, %v1015
    %v1017 = vrot.slane %v1010, %v1016
    %v1018 = vcombine.low %v922, %v929
    %v1020 = vunpack.c.l.s4 1983009808
    %v1021 = vunpack.c.0.s8 %v1020
    %v1022 = vlaneseq
    %v1023 = vshrl.u32 %v1022, 7
    %v1024 = vsub.s32 %v1021, %v1023
    %v1025 = vrot.slane %v1018, %v1024
    %v1026 = vcombine.low %v932, %v933
    %v1028 = vunpack.c.l.s4 1983009808
    %v1029 = vunpack.c.0.s8 %v1028
    %v1030 = vlaneseq
    %v1031 = vshrl.u32 %v1030, 7
    %v1032 = vsub.s32 %v1029, %v1031
    %v1033 = vrot.slane %v1026, %v1032
    %v1034 = vcombine.low %v1009, %v1017
    %v1035 = vcombine.high %v1009, %v1017
    %v1037 = vunpack.c.l.s4 1934713408
    %v1038 = vunpack.c.0.s8 %v1037
    %v1039 = vlaneseq
    %v1040 = vshrl.u32 %v1039, 7
    %v1041 = vsub.s32 %v1038, %v1040
    %v1042 = vrot.slane %v1034, %v1041
    %v1044 = vunpack.c.l.s4 1934713408
    %v1045 = vunpack.c.0.s8 %v1044
    %v1046 = vlaneseq
    %v1047 = vshrl.u32 %v1046, 7
    %v1048 = vsub.s32 %v1045, %v1047
    %v1049 = vrot.slane %v1035, %v1048
    %v1050 = vcombine.low %v1025, %v1033
    %v1051 = vcombine.high %v1025, %v1033
    %v1053 = vunpack.c.l.s4 1934713408
    %v1054 = vunpack.c.0.s8 %v1053
    %v1055 = vlaneseq
    %v1056 = vshrl.u32 %v1055, 7
    %v1057 = vsub.s32 %v1054, %v1056
    %v1058 = vrot.slane %v1050, %v1057
    %v1060 = vunpack.c.l.s4 1934713408
    %v1061 = vunpack.c.0.s8 %v1060
    %v1062 = vlaneseq
    %v1063 = vshrl.u32 %v1062, 7
    %v1064 = vsub.s32 %v1061, %v1063
    %v1065 = vrot.slane %v1051, %v1064
    %v1066 = vcombine.low %v1042, %v1058
    %v1067 = vcombine.high %v1042, %v1058
    %v1068 = vcombine.low %v1049, %v1065
    %v1069 = vcombine.high %v1049, %v1065
    %vm1070 = vcmask 64512
    %v1072 = vsel %vm1070, %v406, 0
    %v1075 = vsel %vm1070, %v702, 0
    %1077 = vmatprep.subr.mxu0 0.0
    %1078 = vmatpush1.xpose.msra.mxu0 %v1075
    %1079 = vmatprep.subr.mxu0 0.0
    %1080 = vmatpush1.xpose.msra.mxu0 0.0
    %1081 = vmatprep.subr.mxu0 0.0
    %1082 = vmatpush1.xpose.msra.mxu0 0.0
    %1083 = vmatprep.subr.mxu0 0.0
    %1084 = vmatpush1.xpose.msra.mxu0 0.0
    %1085 = vmatprep.subr.mxu0 0.0
    %1086 = vmatpush1.xpose.msra.mxu0 0.0
    %1087 = vmatprep.subr.mxu0 0.0
    %1088 = vmatpush1.xpose.msra.mxu0 0.0
    %1089 = vmatprep.subr.mxu0 0.0
    %1090 = vmatpush1.xpose.msra.mxu0 0.0
    %1091 = vmatprep.subr.mxu0 0.0
    %1092 = vmatpush1.xpose.msra.mxu0 0.0
    %1093 = vmatprep.subr.mxu0 0.0
    %1094 = vmatpush1.xpose.msra.mxu0 0.0
    %1095 = vmatprep.subr.mxu0 0.0
    %1096 = vmatpush1.xpose.msra.mxu0 0.0
    %1097 = vmatprep.subr.mxu0 0.0
    %1098 = vmatpush1.xpose.msra.mxu0 0.0
    %1099 = vmatprep.subr.mxu0 0.0
    %1100 = vmatpush1.xpose.msra.mxu0 0.0
    %1101 = vmatprep.subr.mxu0 0.0
    %1102 = vmatpush1.xpose.msra.mxu0 0.0
    %1103 = vmatprep.subr.mxu0 0.0
    %1104 = vmatpush1.xpose.msra.mxu0 0.0
    %1105 = vmatprep.subr.mxu0 0.0
    %1106 = vmatpush1.xpose.msra.mxu0 0.0
    %1107 = vmatprep.subr.mxu0 0.0
    %1108 = vmatpush1.xpose.msra.mxu0 0.0
    %1109 = vmatprep.subr.mxu0 0.0
    %1110 = vmatpush1.xpose.msra.mxu0 0.0
    %1111 = vmatprep.subr.mxu0 0.0
    %1112 = vmatpush1.xpose.msra.mxu0 0.0
    %1113 = vmatprep.subr.mxu0 0.0
    %1114 = vmatpush1.xpose.msra.mxu0 0.0
    %1115 = vmatprep.subr.mxu0 0.0
    %1116 = vmatpush1.xpose.msra.mxu0 0.0
    %1117 = vmatprep.subr.mxu0 0.0
    %1118 = vmatpush1.xpose.msra.mxu0 0.0
    %1119 = vmatprep.subr.mxu0 0.0
    %1120 = vmatpush1.xpose.msra.mxu0 0.0
    %1121 = vmatprep.subr.mxu0 0.0
    %1122 = vmatpush1.xpose.msra.mxu0 0.0
    %1123 = vmatprep.subr.mxu0 0.0
    %1124 = vmatpush1.xpose.msra.mxu0 0.0
    %1125 = vmatprep.subr.mxu0 0.0
    %1126 = vmatpush1.xpose.msra.mxu0 0.0
    %1127 = vmatprep.subr.mxu0 0.0
    %1128 = vmatpush1.xpose.msra.mxu0 0.0
    %1129 = vmatprep.subr.mxu0 0.0
    %1130 = vmatpush1.xpose.msra.mxu0 0.0
    %1131 = vmatprep.subr.mxu0 0.0
    %1132 = vmatpush1.xpose.msra.mxu0 0.0
    %1133 = vmatprep.subr.mxu0 0.0
    %1134 = vmatpush1.xpose.msra.mxu0 0.0
    %1135 = vmatprep.subr.mxu0 0.0
    %1136 = vmatpush1.xpose.msra.mxu0 0.0
    %1137 = vmatprep.subr.mxu0 0.0
    %1138 = vmatpush1.xpose.msra.mxu0 0.0
    %1139 = vmatprep.subr.mxu0 0.0
    %1140 = vmatpush1.xpose.msra.mxu0 0.0
    %1141 = vmatprep.mubr.f32.mxu0 0.0
    %1142 = vmatmul.mubr.f32.gmra.mrb[0].mxu0 %v1072
    %v1143 = vpop.f32.mrb[0].mxu0
    %v1144 = vadd.f32 0.0, %v1143
    %v1145 = vpop.f32.mrb[0].mxu0
    %1146 = vdwg.mxu0
    %v1148 = vsel %vm1070, %v407, 0
    %v1151 = vsel %vm1070, %v703, 0
    %1153 = vmatprep.subr.mxu0 0.0
    %1154 = vmatpush1.xpose.msra.mxu0 %v1151
    %1155 = vmatprep.subr.mxu0 0.0
    %1156 = vmatpush1.xpose.msra.mxu0 0.0
    %1157 = vmatprep.subr.mxu0 0.0
    %1158 = vmatpush1.xpose.msra.mxu0 0.0
    %1159 = vmatprep.subr.mxu0 0.0
    %1160 = vmatpush1.xpose.msra.mxu0 0.0
    %1161 = vmatprep.subr.mxu0 0.0
    %1162 = vmatpush1.xpose.msra.mxu0 0.0
    %1163 = vmatprep.subr.mxu0 0.0
    %1164 = vmatpush1.xpose.msra.mxu0 0.0
    %1165 = vmatprep.subr.mxu0 0.0
    %1166 = vmatpush1.xpose.msra.mxu0 0.0
    %1167 = vmatprep.subr.mxu0 0.0
    %1168 = vmatpush1.xpose.msra.mxu0 0.0
    %1169 = vmatprep.subr.mxu0 0.0
    %1170 = vmatpush1.xpose.msra.mxu0 0.0
    %1171 = vmatprep.subr.mxu0 0.0
    %1172 = vmatpush1.xpose.msra.mxu0 0.0
    %1173 = vmatprep.subr.mxu0 0.0
    %1174 = vmatpush1.xpose.msra.mxu0 0.0
    %1175 = vmatprep.subr.mxu0 0.0
    %1176 = vmatpush1.xpose.msra.mxu0 0.0
    %1177 = vmatprep.subr.mxu0 0.0
    %1178 = vmatpush1.xpose.msra.mxu0 0.0
    %1179 = vmatprep.subr.mxu0 0.0
    %1180 = vmatpush1.xpose.msra.mxu0 0.0
    %1181 = vmatprep.subr.mxu0 0.0
    %1182 = vmatpush1.xpose.msra.mxu0 0.0
    %1183 = vmatprep.subr.mxu0 0.0
    %1184 = vmatpush1.xpose.msra.mxu0 0.0
    %1185 = vmatprep.subr.mxu0 0.0
    %1186 = vmatpush1.xpose.msra.mxu0 0.0
    %1187 = vmatprep.subr.mxu0 0.0
    %1188 = vmatpush1.xpose.msra.mxu0 0.0
    %1189 = vmatprep.subr.mxu0 0.0
    %1190 = vmatpush1.xpose.msra.mxu0 0.0
    %1191 = vmatprep.subr.mxu0 0.0
    %1192 = vmatpush1.xpose.msra.mxu0 0.0
    %1193 = vmatprep.subr.mxu0 0.0
    %1194 = vmatpush1.xpose.msra.mxu0 0.0
    %1195 = vmatprep.subr.mxu0 0.0
    %1196 = vmatpush1.xpose.msra.mxu0 0.0
    %1197 = vmatprep.subr.mxu0 0.0
    %1198 = vmatpush1.xpose.msra.mxu0 0.0
    %1199 = vmatprep.subr.mxu0 0.0
    %1200 = vmatpush1.xpose.msra.mxu0 0.0
    %1201 = vmatprep.subr.mxu0 0.0
    %1202 = vmatpush1.xpose.msra.mxu0 0.0
    %1203 = vmatprep.subr.mxu0 0.0
    %1204 = vmatpush1.xpose.msra.mxu0 0.0
    %1205 = vmatprep.subr.mxu0 0.0
    %1206 = vmatpush1.xpose.msra.mxu0 0.0
    %1207 = vmatprep.subr.mxu0 0.0
    %1208 = vmatpush1.xpose.msra.mxu0 0.0
    %1209 = vmatprep.subr.mxu0 0.0
    %1210 = vmatpush1.xpose.msra.mxu0 0.0
    %1211 = vmatprep.subr.mxu0 0.0
    %1212 = vmatpush1.xpose.msra.mxu0 0.0
    %1213 = vmatprep.subr.mxu0 0.0
    %1214 = vmatpush1.xpose.msra.mxu0 0.0
    %1215 = vmatprep.subr.mxu0 0.0
    %1216 = vmatpush1.xpose.msra.mxu0 0.0
    %1217 = vmatprep.mubr.f32.mxu0 0.0
    %1218 = vmatmul.mubr.f32.gmra.mrb[0].mxu0 %v1148
    %v1219 = vpop.f32.mrb[0].mxu0
    %v1220 = vadd.f32 0.0, %v1219
    %v1221 = vpop.f32.mrb[0].mxu0
    %1222 = vdwg.mxu0
    %v1224 = vsel %vm1070, %v408, 0
    %v1227 = vsel %vm1070, %v704, 0
    %1229 = vmatprep.subr.mxu0 0.0
    %1230 = vmatpush1.xpose.msra.mxu0 %v1227
    %1231 = vmatprep.subr.mxu0 0.0
    %1232 = vmatpush1.xpose.msra.mxu0 0.0
    %1233 = vmatprep.subr.mxu0 0.0
    %1234 = vmatpush1.xpose.msra.mxu0 0.0
    %1235 = vmatprep.subr.mxu0 0.0
    %1236 = vmatpush1.xpose.msra.mxu0 0.0
    %1237 = vmatprep.subr.mxu0 0.0
    %1238 = vmatpush1.xpose.msra.mxu0 0.0
    %1239 = vmatprep.subr.mxu0 0.0
    %1240 = vmatpush1.xpose.msra.mxu0 0.0
    %1241 = vmatprep.subr.mxu0 0.0
    %1242 = vmatpush1.xpose.msra.mxu0 0.0
    %1243 = vmatprep.subr.mxu0 0.0
    %1244 = vmatpush1.xpose.msra.mxu0 0.0
    %1245 = vmatprep.subr.mxu0 0.0
    %1246 = vmatpush1.xpose.msra.mxu0 0.0
    %1247 = vmatprep.subr.mxu0 0.0
    %1248 = vmatpush1.xpose.msra.mxu0 0.0
    %1249 = vmatprep.subr.mxu0 0.0
    %1250 = vmatpush1.xpose.msra.mxu0 0.0
    %1251 = vmatprep.subr.mxu0 0.0
    %1252 = vmatpush1.xpose.msra.mxu0 0.0
    %1253 = vmatprep.subr.mxu0 0.0
    %1254 = vmatpush1.xpose.msra.mxu0 0.0
    %1255 = vmatprep.subr.mxu0 0.0
    %1256 = vmatpush1.xpose.msra.mxu0 0.0
    %1257 = vmatprep.subr.mxu0 0.0
    %1258 = vmatpush1.xpose.msra.mxu0 0.0
    %1259 = vmatprep.subr.mxu0 0.0
    %1260 = vmatpush1.xpose.msra.mxu0 0.0
    %1261 = vmatprep.subr.mxu0 0.0
    %1262 = vmatpush1.xpose.msra.mxu0 0.0
    %1263 = vmatprep.subr.mxu0 0.0
    %1264 = vmatpush1.xpose.msra.mxu0 0.0
    %1265 = vmatprep.subr.mxu0 0.0
    %1266 = vmatpush1.xpose.msra.mxu0 0.0
    %1267 = vmatprep.subr.mxu0 0.0
    %1268 = vmatpush1.xpose.msra.mxu0 0.0
    %1269 = vmatprep.subr.mxu0 0.0
    %1270 = vmatpush1.xpose.msra.mxu0 0.0
    %1271 = vmatprep.subr.mxu0 0.0
    %1272 = vmatpush1.xpose.msra.mxu0 0.0
    %1273 = vmatprep.subr.mxu0 0.0
    %1274 = vmatpush1.xpose.msra.mxu0 0.0
    %1275 = vmatprep.subr.mxu0 0.0
    %1276 = vmatpush1.xpose.msra.mxu0 0.0
    %1277 = vmatprep.subr.mxu0 0.0
    %1278 = vmatpush1.xpose.msra.mxu0 0.0
    %1279 = vmatprep.subr.mxu0 0.0
    %1280 = vmatpush1.xpose.msra.mxu0 0.0
    %1281 = vmatprep.subr.mxu0 0.0
    %1282 = vmatpush1.xpose.msra.mxu0 0.0
    %1283 = vmatprep.subr.mxu0 0.0
    %1284 = vmatpush1.xpose.msra.mxu0 0.0
    %1285 = vmatprep.subr.mxu0 0.0
    %1286 = vmatpush1.xpose.msra.mxu0 0.0
    %1287 = vmatprep.subr.mxu0 0.0
    %1288 = vmatpush1.xpose.msra.mxu0 0.0
    %1289 = vmatprep.subr.mxu0 0.0
    %1290 = vmatpush1.xpose.msra.mxu0 0.0
    %1291 = vmatprep.subr.mxu0 0.0
    %1292 = vmatpush1.xpose.msra.mxu0 0.0
    %1293 = vmatprep.mubr.f32.mxu0 0.0
    %1294 = vmatmul.mubr.f32.gmra.mrb[0].mxu0 %v1224
    %v1295 = vpop.f32.mrb[0].mxu0
    %v1296 = vadd.f32 0.0, %v1295
    %v1297 = vpop.f32.mrb[0].mxu0
    %1298 = vdwg.mxu0
    %v1300 = vsel %vm1070, %v409, 0
    %v1303 = vsel %vm1070, %v705, 0
    %1305 = vmatprep.subr.mxu0 0.0
    %1306 = vmatpush1.xpose.msra.mxu0 %v1303
    %1307 = vmatprep.subr.mxu0 0.0
    %1308 = vmatpush1.xpose.msra.mxu0 0.0
    %1309 = vmatprep.subr.mxu0 0.0
    %1310 = vmatpush1.xpose.msra.mxu0 0.0
    %1311 = vmatprep.subr.mxu0 0.0
    %1312 = vmatpush1.xpose.msra.mxu0 0.0
    %1313 = vmatprep.subr.mxu0 0.0
    %1314 = vmatpush1.xpose.msra.mxu0 0.0
    %1315 = vmatprep.subr.mxu0 0.0
    %1316 = vmatpush1.xpose.msra.mxu0 0.0
    %1317 = vmatprep.subr.mxu0 0.0
    %1318 = vmatpush1.xpose.msra.mxu0 0.0
    %1319 = vmatprep.subr.mxu0 0.0
    %1320 = vmatpush1.xpose.msra.mxu0 0.0
    %1321 = vmatprep.subr.mxu0 0.0
    %1322 = vmatpush1.xpose.msra.mxu0 0.0
    %1323 = vmatprep.subr.mxu0 0.0
    %1324 = vmatpush1.xpose.msra.mxu0 0.0
    %1325 = vmatprep.subr.mxu0 0.0
    %1326 = vmatpush1.xpose.msra.mxu0 0.0
    %1327 = vmatprep.subr.mxu0 0.0
    %1328 = vmatpush1.xpose.msra.mxu0 0.0
    %1329 = vmatprep.subr.mxu0 0.0
    %1330 = vmatpush1.xpose.msra.mxu0 0.0
    %1331 = vmatprep.subr.mxu0 0.0
    %1332 = vmatpush1.xpose.msra.mxu0 0.0
    %1333 = vmatprep.subr.mxu0 0.0
    %1334 = vmatpush1.xpose.msra.mxu0 0.0
    %1335 = vmatprep.subr.mxu0 0.0
    %1336 = vmatpush1.xpose.msra.mxu0 0.0
    %1337 = vmatprep.subr.mxu0 0.0
    %1338 = vmatpush1.xpose.msra.mxu0 0.0
    %1339 = vmatprep.subr.mxu0 0.0
    %1340 = vmatpush1.xpose.msra.mxu0 0.0
    %1341 = vmatprep.subr.mxu0 0.0
    %1342 = vmatpush1.xpose.msra.mxu0 0.0
    %1343 = vmatprep.subr.mxu0 0.0
    %1344 = vmatpush1.xpose.msra.mxu0 0.0
    %1345 = vmatprep.subr.mxu0 0.0
    %1346 = vmatpush1.xpose.msra.mxu0 0.0
    %1347 = vmatprep.subr.mxu0 0.0
    %1348 = vmatpush1.xpose.msra.mxu0 0.0
    %1349 = vmatprep.subr.mxu0 0.0
    %1350 = vmatpush1.xpose.msra.mxu0 0.0
    %1351 = vmatprep.subr.mxu0 0.0
    %1352 = vmatpush1.xpose.msra.mxu0 0.0
    %1353 = vmatprep.subr.mxu0 0.0
    %1354 = vmatpush1.xpose.msra.mxu0 0.0
    %1355 = vmatprep.subr.mxu0 0.0
    %1356 = vmatpush1.xpose.msra.mxu0 0.0
    %1357 = vmatprep.subr.mxu0 0.0
    %1358 = vmatpush1.xpose.msra.mxu0 0.0
    %1359 = vmatprep.subr.mxu0 0.0
    %1360 = vmatpush1.xpose.msra.mxu0 0.0
    %1361 = vmatprep.subr.mxu0 0.0
    %1362 = vmatpush1.xpose.msra.mxu0 0.0
    %1363 = vmatprep.subr.mxu0 0.0
    %1364 = vmatpush1.xpose.msra.mxu0 0.0
    %1365 = vmatprep.subr.mxu0 0.0
    %1366 = vmatpush1.xpose.msra.mxu0 0.0
    %1367 = vmatprep.subr.mxu0 0.0
    %1368 = vmatpush1.xpose.msra.mxu0 0.0
    %1369 = vmatprep.mubr.f32.mxu0 0.0
    %1370 = vmatmul.mubr.f32.gmra.mrb[0].mxu0 %v1300
    %v1371 = vpop.f32.mrb[0].mxu0
    %v1372 = vadd.f32 0.0, %v1371
    %v1373 = vpop.f32.mrb[0].mxu0
    %1374 = vdwg.mxu0
    %v1376 = vsel %vm1070, %v474, 0
    %v1379 = vsel %vm1070, %v770, 0
    %1381 = vmatprep.subr.mxu0 0.0
    %1382 = vmatpush1.xpose.msra.mxu0 %v1379
    %1383 = vmatprep.subr.mxu0 0.0
    %1384 = vmatpush1.xpose.msra.mxu0 0.0
    %1385 = vmatprep.subr.mxu0 0.0
    %1386 = vmatpush1.xpose.msra.mxu0 0.0
    %1387 = vmatprep.subr.mxu0 0.0
    %1388 = vmatpush1.xpose.msra.mxu0 0.0
    %1389 = vmatprep.subr.mxu0 0.0
    %1390 = vmatpush1.xpose.msra.mxu0 0.0
    %1391 = vmatprep.subr.mxu0 0.0
    %1392 = vmatpush1.xpose.msra.mxu0 0.0
    %1393 = vmatprep.subr.mxu0 0.0
    %1394 = vmatpush1.xpose.msra.mxu0 0.0
    %1395 = vmatprep.subr.mxu0 0.0
    %1396 = vmatpush1.xpose.msra.mxu0 0.0
    %1397 = vmatprep.subr.mxu0 0.0
    %1398 = vmatpush1.xpose.msra.mxu0 0.0
    %1399 = vmatprep.subr.mxu0 0.0
    %1400 = vmatpush1.xpose.msra.mxu0 0.0
    %1401 = vmatprep.subr.mxu0 0.0
    %1402 = vmatpush1.xpose.msra.mxu0 0.0
    %1403 = vmatprep.subr.mxu0 0.0
    %1404 = vmatpush1.xpose.msra.mxu0 0.0
    %1405 = vmatprep.subr.mxu0 0.0
    %1406 = vmatpush1.xpose.msra.mxu0 0.0
    %1407 = vmatprep.subr.mxu0 0.0
    %1408 = vmatpush1.xpose.msra.mxu0 0.0
    %1409 = vmatprep.subr.mxu0 0.0
    %1410 = vmatpush1.xpose.msra.mxu0 0.0
    %1411 = vmatprep.subr.mxu0 0.0
    %1412 = vmatpush1.xpose.msra.mxu0 0.0
    %1413 = vmatprep.subr.mxu0 0.0
    %1414 = vmatpush1.xpose.msra.mxu0 0.0
    %1415 = vmatprep.subr.mxu0 0.0
    %1416 = vmatpush1.xpose.msra.mxu0 0.0
    %1417 = vmatprep.subr.mxu0 0.0
    %1418 = vmatpush1.xpose.msra.mxu0 0.0
    %1419 = vmatprep.subr.mxu0 0.0
    %1420 = vmatpush1.xpose.msra.mxu0 0.0
    %1421 = vmatprep.subr.mxu0 0.0
    %1422 = vmatpush1.xpose.msra.mxu0 0.0
    %1423 = vmatprep.subr.mxu0 0.0
    %1424 = vmatpush1.xpose.msra.mxu0 0.0
    %1425 = vmatprep.subr.mxu0 0.0
    %1426 = vmatpush1.xpose.msra.mxu0 0.0
    %1427 = vmatprep.subr.mxu0 0.0
    %1428 = vmatpush1.xpose.msra.mxu0 0.0
    %1429 = vmatprep.subr.mxu0 0.0
    %1430 = vmatpush1.xpose.msra.mxu0 0.0
    %1431 = vmatprep.subr.mxu0 0.0
    %1432 = vmatpush1.xpose.msra.mxu0 0.0
    %1433 = vmatprep.subr.mxu0 0.0
    %1434 = vmatpush1.xpose.msra.mxu0 0.0
    %1435 = vmatprep.subr.mxu0 0.0
    %1436 = vmatpush1.xpose.msra.mxu0 0.0
    %1437 = vmatprep.subr.mxu0 0.0
    %1438 = vmatpush1.xpose.msra.mxu0 0.0
    %1439 = vmatprep.subr.mxu0 0.0
    %1440 = vmatpush1.xpose.msra.mxu0 0.0
    %1441 = vmatprep.subr.mxu0 0.0
    %1442 = vmatpush1.xpose.msra.mxu0 0.0
    %1443 = vmatprep.subr.mxu0 0.0
    %1444 = vmatpush1.xpose.msra.mxu0 0.0
    %1445 = vmatprep.mubr.f32.mxu0 0.0
    %1446 = vmatmul.mubr.f32.gmra.mrb[0].mxu0 %v1376
    %v1447 = vpop.f32.mrb[0].mxu0
    %v1448 = vadd.f32 0.0, %v1447
    %v1449 = vpop.f32.mrb[0].mxu0
    %1450 = vdwg.mxu0
    %v1452 = vsel %vm1070, %v475, 0
    %v1455 = vsel %vm1070, %v771, 0
    %1457 = vmatprep.subr.mxu0 0.0
    %1458 = vmatpush1.xpose.msra.mxu0 %v1455
    %1459 = vmatprep.subr.mxu0 0.0
    %1460 = vmatpush1.xpose.msra.mxu0 0.0
    %1461 = vmatprep.subr.mxu0 0.0
    %1462 = vmatpush1.xpose.msra.mxu0 0.0
    %1463 = vmatprep.subr.mxu0 0.0
    %1464 = vmatpush1.xpose.msra.mxu0 0.0
    %1465 = vmatprep.subr.mxu0 0.0
    %1466 = vmatpush1.xpose.msra.mxu0 0.0
    %1467 = vmatprep.subr.mxu0 0.0
    %1468 = vmatpush1.xpose.msra.mxu0 0.0
    %1469 = vmatprep.subr.mxu0 0.0
    %1470 = vmatpush1.xpose.msra.mxu0 0.0
    %1471 = vmatprep.subr.mxu0 0.0
    %1472 = vmatpush1.xpose.msra.mxu0 0.0
    %1473 = vmatprep.subr.mxu0 0.0
    %1474 = vmatpush1.xpose.msra.mxu0 0.0
    %1475 = vmatprep.subr.mxu0 0.0
    %1476 = vmatpush1.xpose.msra.mxu0 0.0
    %1477 = vmatprep.subr.mxu0 0.0
    %1478 = vmatpush1.xpose.msra.mxu0 0.0
    %1479 = vmatprep.subr.mxu0 0.0
    %1480 = vmatpush1.xpose.msra.mxu0 0.0
    %1481 = vmatprep.subr.mxu0 0.0
    %1482 = vmatpush1.xpose.msra.mxu0 0.0
    %1483 = vmatprep.subr.mxu0 0.0
    %1484 = vmatpush1.xpose.msra.mxu0 0.0
    %1485 = vmatprep.subr.mxu0 0.0
    %1486 = vmatpush1.xpose.msra.mxu0 0.0
    %1487 = vmatprep.subr.mxu0 0.0
    %1488 = vmatpush1.xpose.msra.mxu0 0.0
    %1489 = vmatprep.subr.mxu0 0.0
    %1490 = vmatpush1.xpose.msra.mxu0 0.0
    %1491 = vmatprep.subr.mxu0 0.0
    %1492 = vmatpush1.xpose.msra.mxu0 0.0
    %1493 = vmatprep.subr.mxu0 0.0
    %1494 = vmatpush1.xpose.msra.mxu0 0.0
    %1495 = vmatprep.subr.mxu0 0.0
    %1496 = vmatpush1.xpose.msra.mxu0 0.0
    %1497 = vmatprep.subr.mxu0 0.0
    %1498 = vmatpush1.xpose.msra.mxu0 0.0
    %1499 = vmatprep.subr.mxu0 0.0
    %1500 = vmatpush1.xpose.msra.mxu0 0.0
    %1501 = vmatprep.subr.mxu0 0.0
    %1502 = vmatpush1.xpose.msra.mxu0 0.0
    %1503 = vmatprep.subr.mxu0 0.0
    %1504 = vmatpush1.xpose.msra.mxu0 0.0
    %1505 = vmatprep.subr.mxu0 0.0
    %1506 = vmatpush1.xpose.msra.mxu0 0.0
    %1507 = vmatprep.subr.mxu0 0.0
    %1508 = vmatpush1.xpose.msra.mxu0 0.0
    %1509 = vmatprep.subr.mxu0 0.0
    %1510 = vmatpush1.xpose.msra.mxu0 0.0
    %1511 = vmatprep.subr.mxu0 0.0
    %1512 = vmatpush1.xpose.msra.mxu0 0.0
    %1513 = vmatprep.subr.mxu0 0.0
    %1514 = vmatpush1.xpose.msra.mxu0 0.0
    %1515 = vmatprep.subr.mxu0 0.0
    %1516 = vmatpush1.xpose.msra.mxu0 0.0
    %1517 = vmatprep.subr.mxu0 0.0
    %1518 = vmatpush1.xpose.msra.mxu0 0.0
    %1519 = vmatprep.subr.mxu0 0.0
    %1520 = vmatpush1.xpose.msra.mxu0 0.0
    %1521 = vmatprep.mubr.f32.mxu0 0.0
    %1522 = vmatmul.mubr.f32.gmra.mrb[0].mxu0 %v1452
    %v1523 = vpop.f32.mrb[0].mxu0
    %v1524 = vadd.f32 0.0, %v1523
    %v1525 = vpop.f32.mrb[0].mxu0
    %1526 = vdwg.mxu0
    %v1528 = vsel %vm1070, %v476, 0
    %v1531 = vsel %vm1070, %v772, 0
    %1533 = vmatprep.subr.mxu0 0.0
    %1534 = vmatpush1.xpose.msra.mxu0 %v1531
    %1535 = vmatprep.subr.mxu0 0.0
    %1536 = vmatpush1.xpose.msra.mxu0 0.0
    %1537 = vmatprep.subr.mxu0 0.0
    %1538 = vmatpush1.xpose.msra.mxu0 0.0
    %1539 = vmatprep.subr.mxu0 0.0
    %1540 = vmatpush1.xpose.msra.mxu0 0.0
    %1541 = vmatprep.subr.mxu0 0.0
    %1542 = vmatpush1.xpose.msra.mxu0 0.0
    %1543 = vmatprep.subr.mxu0 0.0
    %1544 = vmatpush1.xpose.msra.mxu0 0.0
    %1545 = vmatprep.subr.mxu0 0.0
    %1546 = vmatpush1.xpose.msra.mxu0 0.0
    %1547 = vmatprep.subr.mxu0 0.0
    %1548 = vmatpush1.xpose.msra.mxu0 0.0
    %1549 = vmatprep.subr.mxu0 0.0
    %1550 = vmatpush1.xpose.msra.mxu0 0.0
    %1551 = vmatprep.subr.mxu0 0.0
    %1552 = vmatpush1.xpose.msra.mxu0 0.0
    %1553 = vmatprep.subr.mxu0 0.0
    %1554 = vmatpush1.xpose.msra.mxu0 0.0
    %1555 = vmatprep.subr.mxu0 0.0
    %1556 = vmatpush1.xpose.msra.mxu0 0.0
    %1557 = vmatprep.subr.mxu0 0.0
    %1558 = vmatpush1.xpose.msra.mxu0 0.0
    %1559 = vmatprep.subr.mxu0 0.0
    %1560 = vmatpush1.xpose.msra.mxu0 0.0
    %1561 = vmatprep.subr.mxu0 0.0
    %1562 = vmatpush1.xpose.msra.mxu0 0.0
    %1563 = vmatprep.subr.mxu0 0.0
    %1564 = vmatpush1.xpose.msra.mxu0 0.0
    %1565 = vmatprep.subr.mxu0 0.0
    %1566 = vmatpush1.xpose.msra.mxu0 0.0
    %1567 = vmatprep.subr.mxu0 0.0
    %1568 = vmatpush1.xpose.msra.mxu0 0.0
    %1569 = vmatprep.subr.mxu0 0.0
    %1570 = vmatpush1.xpose.msra.mxu0 0.0
    %1571 = vmatprep.subr.mxu0 0.0
    %1572 = vmatpush1.xpose.msra.mxu0 0.0
    %1573 = vmatprep.subr.mxu0 0.0
    %1574 = vmatpush1.xpose.msra.mxu0 0.0
    %1575 = vmatprep.subr.mxu0 0.0
    %1576 = vmatpush1.xpose.msra.mxu0 0.0
    %1577 = vmatprep.subr.mxu0 0.0
    %1578 = vmatpush1.xpose.msra.mxu0 0.0
    %1579 = vmatprep.subr.mxu0 0.0
    %1580 = vmatpush1.xpose.msra.mxu0 0.0
    %1581 = vmatprep.subr.mxu0 0.0
    %1582 = vmatpush1.xpose.msra.mxu0 0.0
    %1583 = vmatprep.subr.mxu0 0.0
    %1584 = vmatpush1.xpose.msra.mxu0 0.0
    %1585 = vmatprep.subr.mxu0 0.0
    %1586 = vmatpush1.xpose.msra.mxu0 0.0
    %1587 = vmatprep.subr.mxu0 0.0
    %1588 = vmatpush1.xpose.msra.mxu0 0.0
    %1589 = vmatprep.subr.mxu0 0.0
    %1590 = vmatpush1.xpose.msra.mxu0 0.0
    %1591 = vmatprep.subr.mxu0 0.0
    %1592 = vmatpush1.xpose.msra.mxu0 0.0
    %1593 = vmatprep.subr.mxu0 0.0
    %1594 = vmatpush1.xpose.msra.mxu0 0.0
    %1595 = vmatprep.subr.mxu0 0.0
    %1596 = vmatpush1.xpose.msra.mxu0 0.0
    %1597 = vmatprep.mubr.f32.mxu0 0.0
    %1598 = vmatmul.mubr.f32.gmra.mrb[0].mxu0 %v1528
    %v1599 = vpop.f32.mrb[0].mxu0
    %v1600 = vadd.f32 0.0, %v1599
    %v1601 = vpop.f32.mrb[0].mxu0
    %1602 = vdwg.mxu0
    %v1604 = vsel %vm1070, %v477, 0
    %v1607 = vsel %vm1070, %v773, 0
    %1609 = vmatprep.subr.mxu0 0.0
    %1610 = vmatpush1.xpose.msra.mxu0 %v1607
    %1611 = vmatprep.subr.mxu0 0.0
    %1612 = vmatpush1.xpose.msra.mxu0 0.0
    %1613 = vmatprep.subr.mxu0 0.0
    %1614 = vmatpush1.xpose.msra.mxu0 0.0
    %1615 = vmatprep.subr.mxu0 0.0
    %1616 = vmatpush1.xpose.msra.mxu0 0.0
    %1617 = vmatprep.subr.mxu0 0.0
    %1618 = vmatpush1.xpose.msra.mxu0 0.0
    %1619 = vmatprep.subr.mxu0 0.0
    %1620 = vmatpush1.xpose.msra.mxu0 0.0
    %1621 = vmatprep.subr.mxu0 0.0
    %1622 = vmatpush1.xpose.msra.mxu0 0.0
    %1623 = vmatprep.subr.mxu0 0.0
    %1624 = vmatpush1.xpose.msra.mxu0 0.0
    %1625 = vmatprep.subr.mxu0 0.0
    %1626 = vmatpush1.xpose.msra.mxu0 0.0
    %1627 = vmatprep.subr.mxu0 0.0
    %1628 = vmatpush1.xpose.msra.mxu0 0.0
    %1629 = vmatprep.subr.mxu0 0.0
    %1630 = vmatpush1.xpose.msra.mxu0 0.0
    %1631 = vmatprep.subr.mxu0 0.0
    %1632 = vmatpush1.xpose.msra.mxu0 0.0
    %1633 = vmatprep.subr.mxu0 0.0
    %1634 = vmatpush1.xpose.msra.mxu0 0.0
    %1635 = vmatprep.subr.mxu0 0.0
    %1636 = vmatpush1.xpose.msra.mxu0 0.0
    %1637 = vmatprep.subr.mxu0 0.0
    %1638 = vmatpush1.xpose.msra.mxu0 0.0
    %1639 = vmatprep.subr.mxu0 0.0
    %1640 = vmatpush1.xpose.msra.mxu0 0.0
    %1641 = vmatprep.subr.mxu0 0.0
    %1642 = vmatpush1.xpose.msra.mxu0 0.0
    %1643 = vmatprep.subr.mxu0 0.0
    %1644 = vmatpush1.xpose.msra.mxu0 0.0
    %1645 = vmatprep.subr.mxu0 0.0
    %1646 = vmatpush1.xpose.msra.mxu0 0.0
    %1647 = vmatprep.subr.mxu0 0.0
    %1648 = vmatpush1.xpose.msra.mxu0 0.0
    %1649 = vmatprep.subr.mxu0 0.0
    %1650 = vmatpush1.xpose.msra.mxu0 0.0
    %1651 = vmatprep.subr.mxu0 0.0
    %1652 = vmatpush1.xpose.msra.mxu0 0.0
    %1653 = vmatprep.subr.mxu0 0.0
    %1654 = vmatpush1.xpose.msra.mxu0 0.0
    %1655 = vmatprep.subr.mxu0 0.0
    %1656 = vmatpush1.xpose.msra.mxu0 0.0
    %1657 = vmatprep.subr.mxu0 0.0
    %1658 = vmatpush1.xpose.msra.mxu0 0.0
    %1659 = vmatprep.subr.mxu0 0.0
    %1660 = vmatpush1.xpose.msra.mxu0 0.0
    %1661 = vmatprep.subr.mxu0 0.0
    %1662 = vmatpush1.xpose.msra.mxu0 0.0
    %1663 = vmatprep.subr.mxu0 0.0
    %1664 = vmatpush1.xpose.msra.mxu0 0.0
    %1665 = vmatprep.subr.mxu0 0.0
    %1666 = vmatpush1.xpose.msra.mxu0 0.0
    %1667 = vmatprep.subr.mxu0 0.0
    %1668 = vmatpush1.xpose.msra.mxu0 0.0
    %1669 = vmatprep.subr.mxu0 0.0
    %1670 = vmatpush1.xpose.msra.mxu0 0.0
    %1671 = vmatprep.subr.mxu0 0.0
    %1672 = vmatpush1.xpose.msra.mxu0 0.0
    %1673 = vmatprep.mubr.f32.mxu0 0.0
    %1674 = vmatmul.mubr.f32.gmra.mrb[0].mxu0 %v1604
    %v1675 = vpop.f32.mrb[0].mxu0
    %v1676 = vadd.f32 0.0, %v1675
    %v1677 = vpop.f32.mrb[0].mxu0
    %1678 = vdwg.mxu0
    %v1679 = vsel %vm1070, %v1144, -inf
    %1680 = vmax.xlane.f32.xlu0 %v1679
    %v1681 = vpop.xlane.xlu0 %1680
    %v1682 = vsel %vm1070, %v1220, -inf
    %1683 = vmax.xlane.f32.xlu0 %v1682
    %v1684 = vpop.xlane.xlu0 %1683
    %v1685 = vsel %vm1070, %v1296, -inf
    %1686 = vmax.xlane.f32.xlu0 %v1685
    %v1687 = vpop.xlane.xlu0 %1686
    %v1688 = vsel %vm1070, %v1372, -inf
    %1689 = vmax.xlane.f32.xlu0 %v1688
    %v1690 = vpop.xlane.xlu0 %1689
    %v1691 = vsel %vm1070, %v1448, -inf
    %1692 = vmax.xlane.f32.xlu0 %v1691
    %v1693 = vpop.xlane.xlu0 %1692
    %v1694 = vsel %vm1070, %v1524, -inf
    %1695 = vmax.xlane.f32.xlu0 %v1694
    %v1696 = vpop.xlane.xlu0 %1695
    %v1697 = vsel %vm1070, %v1600, -inf
    %1698 = vmax.xlane.f32.xlu0 %v1697
    %v1699 = vpop.xlane.xlu0 %1698
    %v1700 = vsel %vm1070, %v1676, -inf
    %1701 = vmax.xlane.f32.xlu0 %v1700
    %v1702 = vpop.xlane.xlu0 %1701
    %v1703 = vsub.f32 %v1144, %v1681
    %v1704 = vsub.f32 %v1220, %v1684
    %v1705 = vsub.f32 %v1296, %v1687
    %v1706 = vsub.f32 %v1372, %v1690
    %v1707 = vsub.f32 %v1448, %v1693
    %v1708 = vsub.f32 %v1524, %v1696
    %v1709 = vsub.f32 %v1600, %v1699
    %v1710 = vsub.f32 %v1676, %v1702
    %v1711 = vmul.f32 %v1703, 1.442695
    %v1712 = vpow.pop %v1711
    %v1713 = vmul.f32 %v1704, 1.442695
    %v1714 = vpow.pop %v1713
    %v1715 = vmul.f32 %v1705, 1.442695
    %v1716 = vpow.pop %v1715
    %v1717 = vmul.f32 %v1706, 1.442695
    %v1718 = vpow.pop %v1717
    %v1719 = vmul.f32 %v1707, 1.442695
    %v1720 = vpow.pop %v1719
    %v1721 = vmul.f32 %v1708, 1.442695
    %v1722 = vpow.pop %v1721
    %v1723 = vmul.f32 %v1709, 1.442695
    %v1724 = vpow.pop %v1723
    %v1725 = vmul.f32 %v1710, 1.442695
    %v1726 = vpow.pop %v1725
    %v1727 = vsel %vm1070, %v1712, 0.0
    %1728 = vadd.xlane.f32.xlu0 %v1727
    %v1729 = vpop.xlane.xlu0 %1728
    %v1730 = vsel %vm1070, %v1714, 0.0
    %1731 = vadd.xlane.f32.xlu0 %v1730
    %v1732 = vpop.xlane.xlu0 %1731
    %v1733 = vsel %vm1070, %v1716, 0.0
    %1734 = vadd.xlane.f32.xlu0 %v1733
    %v1735 = vpop.xlane.xlu0 %1734
    %v1736 = vsel %vm1070, %v1718, 0.0
    %1737 = vadd.xlane.f32.xlu0 %v1736
    %v1738 = vpop.xlane.xlu0 %1737
    %v1739 = vsel %vm1070, %v1720, 0.0
    %1740 = vadd.xlane.f32.xlu0 %v1739
    %v1741 = vpop.xlane.xlu0 %1740
    %v1742 = vsel %vm1070, %v1722, 0.0
    %1743 = vadd.xlane.f32.xlu0 %v1742
    %v1744 = vpop.xlane.xlu0 %1743
    %v1745 = vsel %vm1070, %v1724, 0.0
    %1746 = vadd.xlane.f32.xlu0 %v1745
    %v1747 = vpop.xlane.xlu0 %1746
    %v1748 = vsel %vm1070, %v1726, 0.0
    %1749 = vadd.xlane.f32.xlu0 %v1748
    %v1750 = vpop.xlane.xlu0 %1749
    %v1751 = vrcp.pop %v1729
    %v1752 = vmul.f32 %v1712, %v1751
    %v1753 = vrcp.pop %v1732
    %v1754 = vmul.f32 %v1714, %v1753
    %v1755 = vrcp.pop %v1735
    %v1756 = vmul.f32 %v1716, %v1755
    %v1757 = vrcp.pop %v1738
    %v1758 = vmul.f32 %v1718, %v1757
    %v1759 = vrcp.pop %v1741
    %v1760 = vmul.f32 %v1720, %v1759
    %v1761 = vrcp.pop %v1744
    %v1762 = vmul.f32 %v1722, %v1761
    %v1763 = vrcp.pop %v1747
    %v1764 = vmul.f32 %v1724, %v1763
    %v1765 = vrcp.pop %v1750
    %v1766 = vmul.f32 %v1726, %v1765
    %v1768 = vsel %vm1070, %v1752, 0
    %1770 = vmatprep.subr.mxu0 0.0
    %1771 = vmatpush1.msra.mxu0 %v998
    %1772 = vmatprep.subr.mxu0 0.0
    %1773 = vmatpush1.msra.mxu0 0.0
    %1774 = vmatprep.subr.mxu0 0.0
    %1775 = vmatpush1.msra.mxu0 0.0
    %1776 = vmatprep.subr.mxu0 0.0
    %1777 = vmatpush1.msra.mxu0 0.0
    %1778 = vmatprep.subr.mxu0 0.0
    %1779 = vmatpush1.msra.mxu0 0.0
    %1780 = vmatprep.subr.mxu0 0.0
    %1781 = vmatpush1.msra.mxu0 0.0
    %1782 = vmatprep.subr.mxu0 0.0
    %1783 = vmatpush1.msra.mxu0 0.0
    %1784 = vmatprep.subr.mxu0 0.0
    %1785 = vmatpush1.msra.mxu0 0.0
    %1786 = vmatprep.subr.mxu0 0.0
    %1787 = vmatpush1.msra.mxu0 0.0
    %1788 = vmatprep.subr.mxu0 0.0
    %1789 = vmatpush1.msra.mxu0 0.0
    %1790 = vmatprep.subr.mxu0 0.0
    %1791 = vmatpush1.msra.mxu0 0.0
    %1792 = vmatprep.subr.mxu0 0.0
    %1793 = vmatpush1.msra.mxu0 0.0
    %1794 = vmatprep.subr.mxu0 0.0
    %1795 = vmatpush1.msra.mxu0 0.0
    %1796 = vmatprep.subr.mxu0 0.0
    %1797 = vmatpush1.msra.mxu0 0.0
    %1798 = vmatprep.subr.mxu0 0.0
    %1799 = vmatpush1.msra.mxu0 0.0
    %1800 = vmatprep.subr.mxu0 0.0
    %1801 = vmatpush1.msra.mxu0 0.0
    %1802 = vmatprep.subr.mxu0 0.0
    %1803 = vmatpush1.msra.mxu0 0.0
    %1804 = vmatprep.subr.mxu0 0.0
    %1805 = vmatpush1.msra.mxu0 0.0
    %1806 = vmatprep.subr.mxu0 0.0
    %1807 = vmatpush1.msra.mxu0 0.0
    %1808 = vmatprep.subr.mxu0 0.0
    %1809 = vmatpush1.msra.mxu0 0.0
    %1810 = vmatprep.subr.mxu0 0.0
    %1811 = vmatpush1.msra.mxu0 0.0
    %1812 = vmatprep.subr.mxu0 0.0
    %1813 = vmatpush1.msra.mxu0 0.0
    %1814 = vmatprep.subr.mxu0 0.0
    %1815 = vmatpush1.msra.mxu0 0.0
    %1816 = vmatprep.subr.mxu0 0.0
    %1817 = vmatpush1.msra.mxu0 0.0
    %1818 = vmatprep.subr.mxu0 0.0
    %1819 = vmatpush1.msra.mxu0 0.0
    %1820 = vmatprep.subr.mxu0 0.0
    %1821 = vmatpush1.msra.mxu0 0.0
    %1822 = vmatprep.subr.mxu0 0.0
    %1823 = vmatpush1.msra.mxu0 0.0
    %1824 = vmatprep.subr.mxu0 0.0
    %1825 = vmatpush1.msra.mxu0 0.0
    %1826 = vmatprep.subr.mxu0 0.0
    %1827 = vmatpush1.msra.mxu0 0.0
    %1828 = vmatprep.subr.mxu0 0.0
    %1829 = vmatpush1.msra.mxu0 0.0
    %1830 = vmatprep.subr.mxu0 0.0
    %1831 = vmatpush1.msra.mxu0 0.0
    %1832 = vmatprep.subr.mxu0 0.0
    %1833 = vmatpush1.msra.mxu0 0.0
    %1834 = vmatprep.mubr.f32.mxu0 0.0
    %1835 = vmatmul.mubr.f32.gmra.mrb[0].mxu0 %v1768
    %v1836 = vpop.f32.mrb[0].mxu0
    %v1837 = vadd.f32 0.0, %v1836
    %v1838 = vpop.f32.mrb[0].mxu0
    %1839 = vdwg.mxu0
    %v1841 = vsel %vm1070, %v1754, 0
    %1843 = vmatprep.subr.mxu0 0.0
    %1844 = vmatpush1.msra.mxu0 %v999
    %1845 = vmatprep.subr.mxu0 0.0
    %1846 = vmatpush1.msra.mxu0 0.0
    %1847 = vmatprep.subr.mxu0 0.0
    %1848 = vmatpush1.msra.mxu0 0.0
    %1849 = vmatprep.subr.mxu0 0.0
    %1850 = vmatpush1.msra.mxu0 0.0
    %1851 = vmatprep.subr.mxu0 0.0
    %1852 = vmatpush1.msra.mxu0 0.0
    %1853 = vmatprep.subr.mxu0 0.0
    %1854 = vmatpush1.msra.mxu0 0.0
    %1855 = vmatprep.subr.mxu0 0.0
    %1856 = vmatpush1.msra.mxu0 0.0
    %1857 = vmatprep.subr.mxu0 0.0
    %1858 = vmatpush1.msra.mxu0 0.0
    %1859 = vmatprep.subr.mxu0 0.0
    %1860 = vmatpush1.msra.mxu0 0.0
    %1861 = vmatprep.subr.mxu0 0.0
    %1862 = vmatpush1.msra.mxu0 0.0
    %1863 = vmatprep.subr.mxu0 0.0
    %1864 = vmatpush1.msra.mxu0 0.0
    %1865 = vmatprep.subr.mxu0 0.0
    %1866 = vmatpush1.msra.mxu0 0.0
    %1867 = vmatprep.subr.mxu0 0.0
    %1868 = vmatpush1.msra.mxu0 0.0
    %1869 = vmatprep.subr.mxu0 0.0
    %1870 = vmatpush1.msra.mxu0 0.0
    %1871 = vmatprep.subr.mxu0 0.0
    %1872 = vmatpush1.msra.mxu0 0.0
    %1873 = vmatprep.subr.mxu0 0.0
    %1874 = vmatpush1.msra.mxu0 0.0
    %1875 = vmatprep.subr.mxu0 0.0
    %1876 = vmatpush1.msra.mxu0 0.0
    %1877 = vmatprep.subr.mxu0 0.0
    %1878 = vmatpush1.msra.mxu0 0.0
    %1879 = vmatprep.subr.mxu0 0.0
    %1880 = vmatpush1.msra.mxu0 0.0
    %1881 = vmatprep.subr.mxu0 0.0
    %1882 = vmatpush1.msra.mxu0 0.0
    %1883 = vmatprep.subr.mxu0 0.0
    %1884 = vmatpush1.msra.mxu0 0.0
    %1885 = vmatprep.subr.mxu0 0.0
    %1886 = vmatpush1.msra.mxu0 0.0
    %1887 = vmatprep.subr.mxu0 0.0
    %1888 = vmatpush1.msra.mxu0 0.0
    %1889 = vmatprep.subr.mxu0 0.0
    %1890 = vmatpush1.msra.mxu0 0.0
    %1891 = vmatprep.subr.mxu0 0.0
    %1892 = vmatpush1.msra.mxu0 0.0
    %1893 = vmatprep.subr.mxu0 0.0
    %1894 = vmatpush1.msra.mxu0 0.0
    %1895 = vmatprep.subr.mxu0 0.0
    %1896 = vmatpush1.msra.mxu0 0.0
    %1897 = vmatprep.subr.mxu0 0.0
    %1898 = vmatpush1.msra.mxu0 0.0
    %1899 = vmatprep.subr.mxu0 0.0
    %1900 = vmatpush1.msra.mxu0 0.0
    %1901 = vmatprep.subr.mxu0 0.0
    %1902 = vmatpush1.msra.mxu0 0.0
    %1903 = vmatprep.subr.mxu0 0.0
    %1904 = vmatpush1.msra.mxu0 0.0
    %1905 = vmatprep.subr.mxu0 0.0
    %1906 = vmatpush1.msra.mxu0 0.0
    %1907 = vmatprep.mubr.f32.mxu0 0.0
    %1908 = vmatmul.mubr.f32.gmra.mrb[0].mxu0 %v1841
    %v1909 = vpop.f32.mrb[0].mxu0
    %v1910 = vadd.f32 0.0, %v1909
    %v1911 = vpop.f32.mrb[0].mxu0
    %1912 = vdwg.mxu0
    %v1914 = vsel %vm1070, %v1756, 0
    %1916 = vmatprep.subr.mxu0 0.0
    %1917 = vmatpush1.msra.mxu0 %v1000
    %1918 = vmatprep.subr.mxu0 0.0
    %1919 = vmatpush1.msra.mxu0 0.0
    %1920 = vmatprep.subr.mxu0 0.0
    %1921 = vmatpush1.msra.mxu0 0.0
    %1922 = vmatprep.subr.mxu0 0.0
    %1923 = vmatpush1.msra.mxu0 0.0
    %1924 = vmatprep.subr.mxu0 0.0
    %1925 = vmatpush1.msra.mxu0 0.0
    %1926 = vmatprep.subr.mxu0 0.0
    %1927 = vmatpush1.msra.mxu0 0.0
    %1928 = vmatprep.subr.mxu0 0.0
    %1929 = vmatpush1.msra.mxu0 0.0
    %1930 = vmatprep.subr.mxu0 0.0
    %1931 = vmatpush1.msra.mxu0 0.0
    %1932 = vmatprep.subr.mxu0 0.0
    %1933 = vmatpush1.msra.mxu0 0.0
    %1934 = vmatprep.subr.mxu0 0.0
    %1935 = vmatpush1.msra.mxu0 0.0
    %1936 = vmatprep.subr.mxu0 0.0
    %1937 = vmatpush1.msra.mxu0 0.0
    %1938 = vmatprep.subr.mxu0 0.0
    %1939 = vmatpush1.msra.mxu0 0.0
    %1940 = vmatprep.subr.mxu0 0.0
    %1941 = vmatpush1.msra.mxu0 0.0
    %1942 = vmatprep.subr.mxu0 0.0
    %1943 = vmatpush1.msra.mxu0 0.0
    %1944 = vmatprep.subr.mxu0 0.0
    %1945 = vmatpush1.msra.mxu0 0.0
    %1946 = vmatprep.subr.mxu0 0.0
    %1947 = vmatpush1.msra.mxu0 0.0
    %1948 = vmatprep.subr.mxu0 0.0
    %1949 = vmatpush1.msra.mxu0 0.0
    %1950 = vmatprep.subr.mxu0 0.0
    %1951 = vmatpush1.msra.mxu0 0.0
    %1952 = vmatprep.subr.mxu0 0.0
    %1953 = vmatpush1.msra.mxu0 0.0
    %1954 = vmatprep.subr.mxu0 0.0
    %1955 = vmatpush1.msra.mxu0 0.0
    %1956 = vmatprep.subr.mxu0 0.0
    %1957 = vmatpush1.msra.mxu0 0.0
    %1958 = vmatprep.subr.mxu0 0.0
    %1959 = vmatpush1.msra.mxu0 0.0
    %1960 = vmatprep.subr.mxu0 0.0
    %1961 = vmatpush1.msra.mxu0 0.0
    %1962 = vmatprep.subr.mxu0 0.0
    %1963 = vmatpush1.msra.mxu0 0.0
    %1964 = vmatprep.subr.mxu0 0.0
    %1965 = vmatpush1.msra.mxu0 0.0
    %1966 = vmatprep.subr.mxu0 0.0
    %1967 = vmatpush1.msra.mxu0 0.0
    %1968 = vmatprep.subr.mxu0 0.0
    %1969 = vmatpush1.msra.mxu0 0.0
    %1970 = vmatprep.subr.mxu0 0.0
    %1971 = vmatpush1.msra.mxu0 0.0
    %1972 = vmatprep.subr.mxu0 0.0
    %1973 = vmatpush1.msra.mxu0 0.0
    %1974 = vmatprep.subr.mxu0 0.0
    %1975 = vmatpush1.msra.mxu0 0.0
    %1976 = vmatprep.subr.mxu0 0.0
    %1977 = vmatpush1.msra.mxu0 0.0
    %1978 = vmatprep.subr.mxu0 0.0
    %1979 = vmatpush1.msra.mxu0 0.0
    %1980 = vmatprep.mubr.f32.mxu0 0.0
    %1981 = vmatmul.mubr.f32.gmra.mrb[0].mxu0 %v1914
    %v1982 = vpop.f32.mrb[0].mxu0
    %v1983 = vadd.f32 0.0, %v1982
    %v1984 = vpop.f32.mrb[0].mxu0
    %1985 = vdwg.mxu0
    %v1987 = vsel %vm1070, %v1758, 0
    %1989 = vmatprep.subr.mxu0 0.0
    %1990 = vmatpush1.msra.mxu0 %v1001
    %1991 = vmatprep.subr.mxu0 0.0
    %1992 = vmatpush1.msra.mxu0 0.0
    %1993 = vmatprep.subr.mxu0 0.0
    %1994 = vmatpush1.msra.mxu0 0.0
    %1995 = vmatprep.subr.mxu0 0.0
    %1996 = vmatpush1.msra.mxu0 0.0
    %1997 = vmatprep.subr.mxu0 0.0
    %1998 = vmatpush1.msra.mxu0 0.0
    %1999 = vmatprep.subr.mxu0 0.0
    %2000 = vmatpush1.msra.mxu0 0.0
    %2001 = vmatprep.subr.mxu0 0.0
    %2002 = vmatpush1.msra.mxu0 0.0
    %2003 = vmatprep.subr.mxu0 0.0
    %2004 = vmatpush1.msra.mxu0 0.0
    %2005 = vmatprep.subr.mxu0 0.0
    %2006 = vmatpush1.msra.mxu0 0.0
    %2007 = vmatprep.subr.mxu0 0.0
    %2008 = vmatpush1.msra.mxu0 0.0
    %2009 = vmatprep.subr.mxu0 0.0
    %2010 = vmatpush1.msra.mxu0 0.0
    %2011 = vmatprep.subr.mxu0 0.0
    %2012 = vmatpush1.msra.mxu0 0.0
    %2013 = vmatprep.subr.mxu0 0.0
    %2014 = vmatpush1.msra.mxu0 0.0
    %2015 = vmatprep.subr.mxu0 0.0
    %2016 = vmatpush1.msra.mxu0 0.0
    %2017 = vmatprep.subr.mxu0 0.0
    %2018 = vmatpush1.msra.mxu0 0.0
    %2019 = vmatprep.subr.mxu0 0.0
    %2020 = vmatpush1.msra.mxu0 0.0
    %2021 = vmatprep.subr.mxu0 0.0
    %2022 = vmatpush1.msra.mxu0 0.0
    %2023 = vmatprep.subr.mxu0 0.0
    %2024 = vmatpush1.msra.mxu0 0.0
    %2025 = vmatprep.subr.mxu0 0.0
    %2026 = vmatpush1.msra.mxu0 0.0
    %2027 = vmatprep.subr.mxu0 0.0
    %2028 = vmatpush1.msra.mxu0 0.0
    %2029 = vmatprep.subr.mxu0 0.0
    %2030 = vmatpush1.msra.mxu0 0.0
    %2031 = vmatprep.subr.mxu0 0.0
    %2032 = vmatpush1.msra.mxu0 0.0
    %2033 = vmatprep.subr.mxu0 0.0
    %2034 = vmatpush1.msra.mxu0 0.0
    %2035 = vmatprep.subr.mxu0 0.0
    %2036 = vmatpush1.msra.mxu0 0.0
    %2037 = vmatprep.subr.mxu0 0.0
    %2038 = vmatpush1.msra.mxu0 0.0
    %2039 = vmatprep.subr.mxu0 0.0
    %2040 = vmatpush1.msra.mxu0 0.0
    %2041 = vmatprep.subr.mxu0 0.0
    %2042 = vmatpush1.msra.mxu0 0.0
    %2043 = vmatprep.subr.mxu0 0.0
    %2044 = vmatpush1.msra.mxu0 0.0
    %2045 = vmatprep.subr.mxu0 0.0
    %2046 = vmatpush1.msra.mxu0 0.0
    %2047 = vmatprep.subr.mxu0 0.0
    %2048 = vmatpush1.msra.mxu0 0.0
    %2049 = vmatprep.subr.mxu0 0.0
    %2050 = vmatpush1.msra.mxu0 0.0
    %2051 = vmatprep.subr.mxu0 0.0
    %2052 = vmatpush1.msra.mxu0 0.0
    %2053 = vmatprep.mubr.f32.mxu0 0.0
    %2054 = vmatmul.mubr.f32.gmra.mrb[0].mxu0 %v1987
    %v2055 = vpop.f32.mrb[0].mxu0
    %v2056 = vadd.f32 0.0, %v2055
    %v2057 = vpop.f32.mrb[0].mxu0
    %2058 = vdwg.mxu0
    %v2060 = vsel %vm1070, %v1760, 0
    %2062 = vmatprep.subr.mxu0 0.0
    %2063 = vmatpush1.msra.mxu0 %v1066
    %2064 = vmatprep.subr.mxu0 0.0
    %2065 = vmatpush1.msra.mxu0 0.0
    %2066 = vmatprep.subr.mxu0 0.0
    %2067 = vmatpush1.msra.mxu0 0.0
    %2068 = vmatprep.subr.mxu0 0.0
    %2069 = vmatpush1.msra.mxu0 0.0
    %2070 = vmatprep.subr.mxu0 0.0
    %2071 = vmatpush1.msra.mxu0 0.0
    %2072 = vmatprep.subr.mxu0 0.0
    %2073 = vmatpush1.msra.mxu0 0.0
    %2074 = vmatprep.subr.mxu0 0.0
    %2075 = vmatpush1.msra.mxu0 0.0
    %2076 = vmatprep.subr.mxu0 0.0
    %2077 = vmatpush1.msra.mxu0 0.0
    %2078 = vmatprep.subr.mxu0 0.0
    %2079 = vmatpush1.msra.mxu0 0.0
    %2080 = vmatprep.subr.mxu0 0.0
    %2081 = vmatpush1.msra.mxu0 0.0
    %2082 = vmatprep.subr.mxu0 0.0
    %2083 = vmatpush1.msra.mxu0 0.0
    %2084 = vmatprep.subr.mxu0 0.0
    %2085 = vmatpush1.msra.mxu0 0.0
    %2086 = vmatprep.subr.mxu0 0.0
    %2087 = vmatpush1.msra.mxu0 0.0
    %2088 = vmatprep.subr.mxu0 0.0
    %2089 = vmatpush1.msra.mxu0 0.0
    %2090 = vmatprep.subr.mxu0 0.0
    %2091 = vmatpush1.msra.mxu0 0.0
    %2092 = vmatprep.subr.mxu0 0.0
    %2093 = vmatpush1.msra.mxu0 0.0
    %2094 = vmatprep.subr.mxu0 0.0
    %2095 = vmatpush1.msra.mxu0 0.0
    %2096 = vmatprep.subr.mxu0 0.0
    %2097 = vmatpush1.msra.mxu0 0.0
    %2098 = vmatprep.subr.mxu0 0.0
    %2099 = vmatpush1.msra.mxu0 0.0
    %2100 = vmatprep.subr.mxu0 0.0
    %2101 = vmatpush1.msra.mxu0 0.0
    %2102 = vmatprep.subr.mxu0 0.0
    %2103 = vmatpush1.msra.mxu0 0.0
    %2104 = vmatprep.subr.mxu0 0.0
    %2105 = vmatpush1.msra.mxu0 0.0
    %2106 = vmatprep.subr.mxu0 0.0
    %2107 = vmatpush1.msra.mxu0 0.0
    %2108 = vmatprep.subr.mxu0 0.0
    %2109 = vmatpush1.msra.mxu0 0.0
    %2110 = vmatprep.subr.mxu0 0.0
    %2111 = vmatpush1.msra.mxu0 0.0
    %2112 = vmatprep.subr.mxu0 0.0
    %2113 = vmatpush1.msra.mxu0 0.0
    %2114 = vmatprep.subr.mxu0 0.0
    %2115 = vmatpush1.msra.mxu0 0.0
    %2116 = vmatprep.subr.mxu0 0.0
    %2117 = vmatpush1.msra.mxu0 0.0
    %2118 = vmatprep.subr.mxu0 0.0
    %2119 = vmatpush1.msra.mxu0 0.0
    %2120 = vmatprep.subr.mxu0 0.0
    %2121 = vmatpush1.msra.mxu0 0.0
    %2122 = vmatprep.subr.mxu0 0.0
    %2123 = vmatpush1.msra.mxu0 0.0
    %2124 = vmatprep.subr.mxu0 0.0
    %2125 = vmatpush1.msra.mxu0 0.0
    %2126 = vmatprep.mubr.f32.mxu0 0.0
    %2127 = vmatmul.mubr.f32.gmra.mrb[0].mxu0 %v2060
    %v2128 = vpop.f32.mrb[0].mxu0
    %v2129 = vadd.f32 0.0, %v2128
    %v2130 = vpop.f32.mrb[0].mxu0
    %2131 = vdwg.mxu0
    %v2133 = vsel %vm1070, %v1762, 0
    %2135 = vmatprep.subr.mxu0 0.0
    %2136 = vmatpush1.msra.mxu0 %v1067
    %2137 = vmatprep.subr.mxu0 0.0
    %2138 = vmatpush1.msra.mxu0 0.0
    %2139 = vmatprep.subr.mxu0 0.0
    %2140 = vmatpush1.msra.mxu0 0.0
    %2141 = vmatprep.subr.mxu0 0.0
    %2142 = vmatpush1.msra.mxu0 0.0
    %2143 = vmatprep.subr.mxu0 0.0
    %2144 = vmatpush1.msra.mxu0 0.0
    %2145 = vmatprep.subr.mxu0 0.0
    %2146 = vmatpush1.msra.mxu0 0.0
    %2147 = vmatprep.subr.mxu0 0.0
    %2148 = vmatpush1.msra.mxu0 0.0
    %2149 = vmatprep.subr.mxu0 0.0
    %2150 = vmatpush1.msra.mxu0 0.0
    %2151 = vmatprep.subr.mxu0 0.0
    %2152 = vmatpush1.msra.mxu0 0.0
    %2153 = vmatprep.subr.mxu0 0.0
    %2154 = vmatpush1.msra.mxu0 0.0
    %2155 = vmatprep.subr.mxu0 0.0
    %2156 = vmatpush1.msra.mxu0 0.0
    %2157 = vmatprep.subr.mxu0 0.0
    %2158 = vmatpush1.msra.mxu0 0.0
    %2159 = vmatprep.subr.mxu0 0.0
    %2160 = vmatpush1.msra.mxu0 0.0
    %2161 = vmatprep.subr.mxu0 0.0
    %2162 = vmatpush1.msra.mxu0 0.0
    %2163 = vmatprep.subr.mxu0 0.0
    %2164 = vmatpush1.msra.mxu0 0.0
    %2165 = vmatprep.subr.mxu0 0.0
    %2166 = vmatpush1.msra.mxu0 0.0
    %2167 = vmatprep.subr.mxu0 0.0
    %2168 = vmatpush1.msra.mxu0 0.0
    %2169 = vmatprep.subr.mxu0 0.0
    %2170 = vmatpush1.msra.mxu0 0.0
    %2171 = vmatprep.subr.mxu0 0.0
    %2172 = vmatpush1.msra.mxu0 0.0
    %2173 = vmatprep.subr.mxu0 0.0
    %2174 = vmatpush1.msra.mxu0 0.0
    %2175 = vmatprep.subr.mxu0 0.0
    %2176 = vmatpush1.msra.mxu0 0.0
    %2177 = vmatprep.subr.mxu0 0.0
    %2178 = vmatpush1.msra.mxu0 0.0
    %2179 = vmatprep.subr.mxu0 0.0
    %2180 = vmatpush1.msra.mxu0 0.0
    %2181 = vmatprep.subr.mxu0 0.0
    %2182 = vmatpush1.msra.mxu0 0.0
    %2183 = vmatprep.subr.mxu0 0.0
    %2184 = vmatpush1.msra.mxu0 0.0
    %2185 = vmatprep.subr.mxu0 0.0
    %2186 = vmatpush1.msra.mxu0 0.0
    %2187 = vmatprep.subr.mxu0 0.0
    %2188 = vmatpush1.msra.mxu0 0.0
    %2189 = vmatprep.subr.mxu0 0.0
    %2190 = vmatpush1.msra.mxu0 0.0
    %2191 = vmatprep.subr.mxu0 0.0
    %2192 = vmatpush1.msra.mxu0 0.0
    %2193 = vmatprep.subr.mxu0 0.0
    %2194 = vmatpush1.msra.mxu0 0.0
    %2195 = vmatprep.subr.mxu0 0.0
    %2196 = vmatpush1.msra.mxu0 0.0
    %2197 = vmatprep.subr.mxu0 0.0
    %2198 = vmatpush1.msra.mxu0 0.0
    %2199 = vmatprep.mubr.f32.mxu0 0.0
    %2200 = vmatmul.mubr.f32.gmra.mrb[0].mxu0 %v2133
    %v2201 = vpop.f32.mrb[0].mxu0
    %v2202 = vadd.f32 0.0, %v2201
    %v2203 = vpop.f32.mrb[0].mxu0
    %2204 = vdwg.mxu0
    %v2206 = vsel %vm1070, %v1764, 0
    %2208 = vmatprep.subr.mxu0 0.0
    %2209 = vmatpush1.msra.mxu0 %v1068
    %2210 = vmatprep.subr.mxu0 0.0
    %2211 = vmatpush1.msra.mxu0 0.0
    %2212 = vmatprep.subr.mxu0 0.0
    %2213 = vmatpush1.msra.mxu0 0.0
    %2214 = vmatprep.subr.mxu0 0.0
    %2215 = vmatpush1.msra.mxu0 0.0
    %2216 = vmatprep.subr.mxu0 0.0
    %2217 = vmatpush1.msra.mxu0 0.0
    %2218 = vmatprep.subr.mxu0 0.0
    %2219 = vmatpush1.msra.mxu0 0.0
    %2220 = vmatprep.subr.mxu0 0.0
    %2221 = vmatpush1.msra.mxu0 0.0
    %2222 = vmatprep.subr.mxu0 0.0
    %2223 = vmatpush1.msra.mxu0 0.0
    %2224 = vmatprep.subr.mxu0 0.0
    %2225 = vmatpush1.msra.mxu0 0.0
    %2226 = vmatprep.subr.mxu0 0.0
    %2227 = vmatpush1.msra.mxu0 0.0
    %2228 = vmatprep.subr.mxu0 0.0
    %2229 = vmatpush1.msra.mxu0 0.0
    %2230 = vmatprep.subr.mxu0 0.0
    %2231 = vmatpush1.msra.mxu0 0.0
    %2232 = vmatprep.subr.mxu0 0.0
    %2233 = vmatpush1.msra.mxu0 0.0
    %2234 = vmatprep.subr.mxu0 0.0
    %2235 = vmatpush1.msra.mxu0 0.0
    %2236 = vmatprep.subr.mxu0 0.0
    %2237 = vmatpush1.msra.mxu0 0.0
    %2238 = vmatprep.subr.mxu0 0.0
    %2239 = vmatpush1.msra.mxu0 0.0
    %2240 = vmatprep.subr.mxu0 0.0
    %2241 = vmatpush1.msra.mxu0 0.0
    %2242 = vmatprep.subr.mxu0 0.0
    %2243 = vmatpush1.msra.mxu0 0.0
    %2244 = vmatprep.subr.mxu0 0.0
    %2245 = vmatpush1.msra.mxu0 0.0
    %2246 = vmatprep.subr.mxu0 0.0
    %2247 = vmatpush1.msra.mxu0 0.0
    %2248 = vmatprep.subr.mxu0 0.0
    %2249 = vmatpush1.msra.mxu0 0.0
    %2250 = vmatprep.subr.mxu0 0.0
    %2251 = vmatpush1.msra.mxu0 0.0
    %2252 = vmatprep.subr.mxu0 0.0
    %2253 = vmatpush1.msra.mxu0 0.0
    %2254 = vmatprep.subr.mxu0 0.0
    %2255 = vmatpush1.msra.mxu0 0.0
    %2256 = vmatprep.subr.mxu0 0.0
    %2257 = vmatpush1.msra.mxu0 0.0
    %2258 = vmatprep.subr.mxu0 0.0
    %2259 = vmatpush1.msra.mxu0 0.0
    %2260 = vmatprep.subr.mxu0 0.0
    %2261 = vmatpush1.msra.mxu0 0.0
    %2262 = vmatprep.subr.mxu0 0.0
    %2263 = vmatpush1.msra.mxu0 0.0
    %2264 = vmatprep.subr.mxu0 0.0
    %2265 = vmatpush1.msra.mxu0 0.0
    %2266 = vmatprep.subr.mxu0 0.0
    %2267 = vmatpush1.msra.mxu0 0.0
    %2268 = vmatprep.subr.mxu0 0.0
    %2269 = vmatpush1.msra.mxu0 0.0
    %2270 = vmatprep.subr.mxu0 0.0
    %2271 = vmatpush1.msra.mxu0 0.0
    %2272 = vmatprep.mubr.f32.mxu0 0.0
    %2273 = vmatmul.mubr.f32.gmra.mrb[0].mxu0 %v2206
    %v2274 = vpop.f32.mrb[0].mxu0
    %v2275 = vadd.f32 0.0, %v2274
    %v2276 = vpop.f32.mrb[0].mxu0
    %2277 = vdwg.mxu0
    %v2279 = vsel %vm1070, %v1766, 0
    %2281 = vmatprep.subr.mxu0 0.0
    %2282 = vmatpush1.msra.mxu0 %v1069
    %2283 = vmatprep.subr.mxu0 0.0
    %2284 = vmatpush1.msra.mxu0 0.0
    %2285 = vmatprep.subr.mxu0 0.0
    %2286 = vmatpush1.msra.mxu0 0.0
    %2287 = vmatprep.subr.mxu0 0.0
    %2288 = vmatpush1.msra.mxu0 0.0
    %2289 = vmatprep.subr.mxu0 0.0
    %2290 = vmatpush1.msra.mxu0 0.0
    %2291 = vmatprep.subr.mxu0 0.0
    %2292 = vmatpush1.msra.mxu0 0.0
    %2293 = vmatprep.subr.mxu0 0.0
    %2294 = vmatpush1.msra.mxu0 0.0
    %2295 = vmatprep.subr.mxu0 0.0
    %2296 = vmatpush1.msra.mxu0 0.0
    %2297 = vmatprep.subr.mxu0 0.0
    %2298 = vmatpush1.msra.mxu0 0.0
    %2299 = vmatprep.subr.mxu0 0.0
    %2300 = vmatpush1.msra.mxu0 0.0
    %2301 = vmatprep.subr.mxu0 0.0
    %2302 = vmatpush1.msra.mxu0 0.0
    %2303 = vmatprep.subr.mxu0 0.0
    %2304 = vmatpush1.msra.mxu0 0.0
    %2305 = vmatprep.subr.mxu0 0.0
    %2306 = vmatpush1.msra.mxu0 0.0
    %2307 = vmatprep.subr.mxu0 0.0
    %2308 = vmatpush1.msra.mxu0 0.0
    %2309 = vmatprep.subr.mxu0 0.0
    %2310 = vmatpush1.msra.mxu0 0.0
    %2311 = vmatprep.subr.mxu0 0.0
    %2312 = vmatpush1.msra.mxu0 0.0
    %2313 = vmatprep.subr.mxu0 0.0
    %2314 = vmatpush1.msra.mxu0 0.0
    %2315 = vmatprep.subr.mxu0 0.0
    %2316 = vmatpush1.msra.mxu0 0.0
    %2317 = vmatprep.subr.mxu0 0.0
    %2318 = vmatpush1.msra.mxu0 0.0
    %2319 = vmatprep.subr.mxu0 0.0
    %2320 = vmatpush1.msra.mxu0 0.0
    %2321 = vmatprep.subr.mxu0 0.0
    %2322 = vmatpush1.msra.mxu0 0.0
    %2323 = vmatprep.subr.mxu0 0.0
    %2324 = vmatpush1.msra.mxu0 0.0
    %2325 = vmatprep.subr.mxu0 0.0
    %2326 = vmatpush1.msra.mxu0 0.0
    %2327 = vmatprep.subr.mxu0 0.0
    %2328 = vmatpush1.msra.mxu0 0.0
    %2329 = vmatprep.subr.mxu0 0.0
    %2330 = vmatpush1.msra.mxu0 0.0
    %2331 = vmatprep.subr.mxu0 0.0
    %2332 = vmatpush1.msra.mxu0 0.0
    %2333 = vmatprep.subr.mxu0 0.0
    %2334 = vmatpush1.msra.mxu0 0.0
    %2335 = vmatprep.subr.mxu0 0.0
    %2336 = vmatpush1.msra.mxu0 0.0
    %2337 = vmatprep.subr.mxu0 0.0
    %2338 = vmatpush1.msra.mxu0 0.0
    %2339 = vmatprep.subr.mxu0 0.0
    %2340 = vmatpush1.msra.mxu0 0.0
    %2341 = vmatprep.subr.mxu0 0.0
    %2342 = vmatpush1.msra.mxu0 0.0
    %2343 = vmatprep.subr.mxu0 0.0
    %2344 = vmatpush1.msra.mxu0 0.0
    %2345 = vmatprep.mubr.f32.mxu0 0.0
    %2346 = vmatmul.mubr.f32.gmra.mrb[0].mxu0 %v2279
    %v2347 = vpop.f32.mrb[0].mxu0
    %v2348 = vadd.f32 0.0, %v2347
    %v2349 = vpop.f32.mrb[0].mxu0
    %2350 = vdwg.mxu0
    %v2351 = vcombine.low %v1837, %v1983
    %v2352 = vcombine.high %v1837, %v1983
    %v2354 = vunpack.c.l.s4 1983009808
    %v2355 = vunpack.c.0.s8 %v2354
    %v2356 = vlaneseq
    %v2357 = vshrl.u32 %v2356, 7
    %v2358 = vsub.s32 %v2355, %v2357
    %v2359 = vrot.slane %v2351, %v2358
    %v2361 = vunpack.c.l.s4 1983009808
    %v2362 = vunpack.c.0.s8 %v2361
    %v2363 = vlaneseq
    %v2364 = vshrl.u32 %v2363, 7
    %v2365 = vsub.s32 %v2362, %v2364
    %v2366 = vrot.slane %v2352, %v2365
    %v2367 = vcombine.low %v1910, %v2056
    %v2368 = vcombine.high %v1910, %v2056
    %v2370 = vunpack.c.l.s4 1983009808
    %v2371 = vunpack.c.0.s8 %v2370
    %v2372 = vlaneseq
    %v2373 = vshrl.u32 %v2372, 7
    %v2374 = vsub.s32 %v2371, %v2373
    %v2375 = vrot.slane %v2367, %v2374
    %v2377 = vunpack.c.l.s4 1983009808
    %v2378 = vunpack.c.0.s8 %v2377
    %v2379 = vlaneseq
    %v2380 = vshrl.u32 %v2379, 7
    %v2381 = vsub.s32 %v2378, %v2380
    %v2382 = vrot.slane %v2368, %v2381
    %v2383 = vcombine.low %v2359, %v2375
    %v2384 = vcombine.high %v2359, %v2375
    %v2386 = vunpack.c.l.s4 1934713408
    %v2387 = vunpack.c.0.s8 %v2386
    %v2388 = vlaneseq
    %v2389 = vshrl.u32 %v2388, 7
    %v2390 = vsub.s32 %v2387, %v2389
    %v2391 = vrot.slane %v2383, %v2390
    %v2393 = vunpack.c.l.s4 1934713408
    %v2394 = vunpack.c.0.s8 %v2393
    %v2395 = vlaneseq
    %v2396 = vshrl.u32 %v2395, 7
    %v2397 = vsub.s32 %v2394, %v2396
    %v2398 = vrot.slane %v2384, %v2397
    %v2399 = vcombine.low %v2366, %v2382
    %v2400 = vcombine.high %v2366, %v2382
    %v2402 = vunpack.c.l.s4 1934713408
    %v2403 = vunpack.c.0.s8 %v2402
    %v2404 = vlaneseq
    %v2405 = vshrl.u32 %v2404, 7
    %v2406 = vsub.s32 %v2403, %v2405
    %v2407 = vrot.slane %v2399, %v2406
    %v2409 = vunpack.c.l.s4 1934713408
    %v2410 = vunpack.c.0.s8 %v2409
    %v2411 = vlaneseq
    %v2412 = vshrl.u32 %v2411, 7
    %v2413 = vsub.s32 %v2410, %v2412
    %v2414 = vrot.slane %v2400, %v2413
    %v2415 = vcombine.high %v2391, 0.0
    %v2416 = vcombine.high %v2398, 0.0
    %v2417 = vcombine.high %v2407, 0.0
    %v2418 = vcombine.high %v2414, 0.0
    %v2419 = vcombine.low %v2129, %v2275
    %v2420 = vcombine.high %v2129, %v2275
    %v2422 = vunpack.c.l.s4 1983009808
    %v2423 = vunpack.c.0.s8 %v2422
    %v2424 = vlaneseq
    %v2425 = vshrl.u32 %v2424, 7
    %v2426 = vsub.s32 %v2423, %v2425
    %v2427 = vrot.slane %v2419, %v2426
    %v2429 = vunpack.c.l.s4 1983009808
    %v2430 = vunpack.c.0.s8 %v2429
    %v2431 = vlaneseq
    %v2432 = vshrl.u32 %v2431, 7
    %v2433 = vsub.s32 %v2430, %v2432
    %v2434 = vrot.slane %v2420, %v2433
    %v2435 = vcombine.low %v2202, %v2348
    %v2436 = vcombine.high %v2202, %v2348
    %v2438 = vunpack.c.l.s4 1983009808
    %v2439 = vunpack.c.0.s8 %v2438
    %v2440 = vlaneseq
    %v2441 = vshrl.u32 %v2440, 7
    %v2442 = vsub.s32 %v2439, %v2441
    %v2443 = vrot.slane %v2435, %v2442
    %v2445 = vunpack.c.l.s4 1983009808
    %v2446 = vunpack.c.0.s8 %v2445
    %v2447 = vlaneseq
    %v2448 = vshrl.u32 %v2447, 7
    %v2449 = vsub.s32 %v2446, %v2448
    %v2450 = vrot.slane %v2436, %v2449
    %v2451 = vcombine.low %v2427, %v2443
    %v2452 = vcombine.high %v2427, %v2443
    %v2454 = vunpack.c.l.s4 1934713408
    %v2455 = vunpack.c.0.s8 %v2454
    %v2456 = vlaneseq
    %v2457 = vshrl.u32 %v2456, 7
    %v2458 = vsub.s32 %v2455, %v2457
    %v2459 = vrot.slane %v2451, %v2458
    %v2461 = vunpack.c.l.s4 1934713408
    %v2462 = vunpack.c.0.s8 %v2461
    %v2463 = vlaneseq
    %v2464 = vshrl.u32 %v2463, 7
    %v2465 = vsub.s32 %v2462, %v2464
    %v2466 = vrot.slane %v2452, %v2465
    %v2467 = vcombine.low %v2434, %v2450
    %v2468 = vcombine.high %v2434, %v2450
    %v2470 = vunpack.c.l.s4 1934713408
    %v2471 = vunpack.c.0.s8 %v2470
    %v2472 = vlaneseq
    %v2473 = vshrl.u32 %v2472, 7
    %v2474 = vsub.s32 %v2471, %v2473
    %v2475 = vrot.slane %v2467, %v2474
    %v2477 = vunpack.c.l.s4 1934713408
    %v2478 = vunpack.c.0.s8 %v2477
    %v2479 = vlaneseq
    %v2480 = vshrl.u32 %v2479, 7
    %v2481 = vsub.s32 %v2478, %v2480
    %v2482 = vrot.slane %v2468, %v2481
    %v2483 = vcombine.high %v2459, 0.0
    %v2484 = vcombine.high %v2466, 0.0
    %v2485 = vcombine.high %v2475, 0.0
    %v2486 = vcombine.high %v2482, 0.0
    %v2487 = vcombine.low %v2391, %v2398
    %v2489 = vunpack.c.l.s4 1983009808
    %v2490 = vunpack.c.0.s8 %v2489
    %v2491 = vlaneseq
    %v2492 = vshrl.u32 %v2491, 7
    %v2493 = vsub.s32 %v2490, %v2492
    %v2494 = vrot.slane %v2487, %v2493
    %v2495 = vcombine.low %v2415, %v2416
    %v2497 = vunpack.c.l.s4 1983009808
    %v2498 = vunpack.c.0.s8 %v2497
    %v2499 = vlaneseq
    %v2500 = vshrl.u32 %v2499, 7
    %v2501 = vsub.s32 %v2498, %v2500
    %v2502 = vrot.slane %v2495, %v2501
    %v2503 = vcombine.low %v2407, %v2414
    %v2505 = vunpack.c.l.s4 1983009808
    %v2506 = vunpack.c.0.s8 %v2505
    %v2507 = vlaneseq
    %v2508 = vshrl.u32 %v2507, 7
    %v2509 = vsub.s32 %v2506, %v2508
    %v2510 = vrot.slane %v2503, %v2509
    %v2511 = vcombine.low %v2417, %v2418
    %v2513 = vunpack.c.l.s4 1983009808
    %v2514 = vunpack.c.0.s8 %v2513
    %v2515 = vlaneseq
    %v2516 = vshrl.u32 %v2515, 7
    %v2517 = vsub.s32 %v2514, %v2516
    %v2518 = vrot.slane %v2511, %v2517
    %v2519 = vcombine.low %v2494, %v2502
    %v2520 = vcombine.high %v2494, %v2502
    %v2522 = vunpack.c.l.s4 1934713408
    %v2523 = vunpack.c.0.s8 %v2522
    %v2524 = vlaneseq
    %v2525 = vshrl.u32 %v2524, 7
    %v2526 = vsub.s32 %v2523, %v2525
    %v2527 = vrot.slane %v2519, %v2526
    %v2529 = vunpack.c.l.s4 1934713408
    %v2530 = vunpack.c.0.s8 %v2529
    %v2531 = vlaneseq
    %v2532 = vshrl.u32 %v2531, 7
    %v2533 = vsub.s32 %v2530, %v2532
    %v2534 = vrot.slane %v2520, %v2533
    %v2535 = vcombine.low %v2510, %v2518
    %v2536 = vcombine.high %v2510, %v2518
    %v2538 = vunpack.c.l.s4 1934713408
    %v2539 = vunpack.c.0.s8 %v2538
    %v2540 = vlaneseq
    %v2541 = vshrl.u32 %v2540, 7
    %v2542 = vsub.s32 %v2539, %v2541
    %v2543 = vrot.slane %v2535, %v2542
    %v2545 = vunpack.c.l.s4 1934713408
    %v2546 = vunpack.c.0.s8 %v2545
    %v2547 = vlaneseq
    %v2548 = vshrl.u32 %v2547, 7
    %v2549 = vsub.s32 %v2546, %v2548
    %v2550 = vrot.slane %v2536, %v2549
    %v2551 = vcombine.low %v2527, %v2543
    %v2552 = vcombine.high %v2527, %v2543
    %v2553 = vcombine.low %v2534, %v2550
    %v2554 = vcombine.high %v2534, %v2550
    %v2555 = vcombine.low %v2459, %v2466
    %v2557 = vunpack.c.l.s4 1983009808
    %v2558 = vunpack.c.0.s8 %v2557
    %v2559 = vlaneseq
    %v2560 = vshrl.u32 %v2559, 7
    %v2561 = vsub.s32 %v2558, %v2560
    %v2562 = vrot.slane %v2555, %v2561
    %v2563 = vcombine.low %v2483, %v2484
    %v2565 = vunpack.c.l.s4 1983009808
    %v2566 = vunpack.c.0.s8 %v2565
    %v2567 = vlaneseq
    %v2568 = vshrl.u32 %v2567, 7
    %v2569 = vsub.s32 %v2566, %v2568
    %v2570 = vrot.slane %v2563, %v2569
    %v2571 = vcombine.low %v2475, %v2482
    %v2573 = vunpack.c.l.s4 1983009808
    %v2574 = vunpack.c.0.s8 %v2573
    %v2575 = vlaneseq
    %v2576 = vshrl.u32 %v2575, 7
    %v2577 = vsub.s32 %v2574, %v2576
    %v2578 = vrot.slane %v2571, %v2577
    %v2579 = vcombine.low %v2485, %v2486
    %v2581 = vunpack.c.l.s4 1983009808
    %v2582 = vunpack.c.0.s8 %v2581
    %v2583 = vlaneseq
    %v2584 = vshrl.u32 %v2583, 7
    %v2585 = vsub.s32 %v2582, %v2584
    %v2586 = vrot.slane %v2579, %v2585
    %v2587 = vcombine.low %v2562, %v2570
    %v2588 = vcombine.high %v2562, %v2570
    %v2590 = vunpack.c.l.s4 1934713408
    %v2591 = vunpack.c.0.s8 %v2590
    %v2592 = vlaneseq
    %v2593 = vshrl.u32 %v2592, 7
    %v2594 = vsub.s32 %v2591, %v2593
    %v2595 = vrot.slane %v2587, %v2594
    %v2597 = vunpack.c.l.s4 1934713408
    %v2598 = vunpack.c.0.s8 %v2597
    %v2599 = vlaneseq
    %v2600 = vshrl.u32 %v2599, 7
    %v2601 = vsub.s32 %v2598, %v2600
    %v2602 = vrot.slane %v2588, %v2601
    %v2603 = vcombine.low %v2578, %v2586
    %v2604 = vcombine.high %v2578, %v2586
    %v2606 = vunpack.c.l.s4 1934713408
    %v2607 = vunpack.c.0.s8 %v2606
    %v2608 = vlaneseq
    %v2609 = vshrl.u32 %v2608, 7
    %v2610 = vsub.s32 %v2607, %v2609
    %v2611 = vrot.slane %v2603, %v2610
    %v2613 = vunpack.c.l.s4 1934713408
    %v2614 = vunpack.c.0.s8 %v2613
    %v2615 = vlaneseq
    %v2616 = vshrl.u32 %v2615, 7
    %v2617 = vsub.s32 %v2614, %v2616
    %v2618 = vrot.slane %v2604, %v2617
    %v2619 = vcombine.low %v2595, %v2611
    %v2620 = vcombine.high %v2595, %v2611
    %v2621 = vcombine.low %v2602, %v2618
    %v2622 = vcombine.high %v2602, %v2618
    %2625 = vrot.lane.b32.xlu0 %v2552, 8
    %v2626 = vpop.permute.xlu0 %2625
    %2627 = vrot.lane.b32.xlu0 %v2620, 8
    %v2628 = vpop.permute.xlu0 %2627
    %2633 = vrot.lane.b32.xlu0 %v2553, 16
    %v2634 = vpop.permute.xlu0 %2633
    %2635 = vrot.lane.b32.xlu0 %v2621, 16
    %v2636 = vpop.permute.xlu0 %2635
    %2641 = vrot.lane.b32.xlu0 %v2554, 24
    %v2642 = vpop.permute.xlu0 %2641
    %2643 = vrot.lane.b32.xlu0 %v2622, 24
    %v2644 = vpop.permute.xlu0 %2643
    %v2647 = vsel %vm1070, %v2551, %v2626
    %v2648 = vsel %vm1070, %v2619, %v2628
    %vm2649 = vcmask 130048
    %v2650 = vsel %vm2649, %v2647, %v2634
    %v2651 = vsel %vm2649, %v2648, %v2636
    %vm2652 = vcmask 195584
    %v2653 = vsel %vm2652, %v2650, %v2642
    %v2654 = vsel %vm2652, %v2651, %v2644
    %v2655 = vlaneseq
    %v2656 = vshrl.u32 %v2655, 7
    %v2657 = vsub.s32 0, %v2656
    %v2658 = vrot.slane %v44, %v2657
    %v2660 = vsel %vm94, %v2653, 0
    %v2663 = vsel %vm94, %v2654, 0
    %2665 = vmatprep.subr.mxu0 0.0
    %2666 = vmatpush1.msra.mxu0 %v27
    %2667 = vmatprep.subr.mxu0 0.0
    %2668 = vmatpush1.msra.mxu0 %v28
    %2669 = vmatprep.subr.mxu0 0.0
    %2670 = vmatpush1.msra.mxu0 %v29
    %2671 = vmatprep.subr.mxu0 0.0
    %2672 = vmatpush1.msra.mxu0 %v30
    %2673 = vmatprep.subr.mxu0 0.0
    %2674 = vmatpush1.msra.mxu0 0.0
    %2675 = vmatprep.subr.mxu0 0.0
    %2676 = vmatpush1.msra.mxu0 0.0
    %2677 = vmatprep.subr.mxu0 0.0
    %2678 = vmatpush1.msra.mxu0 0.0
    %2679 = vmatprep.subr.mxu0 0.0
    %2680 = vmatpush1.msra.mxu0 0.0
    %2681 = vmatprep.subr.mxu0 0.0
    %2682 = vmatpush1.msra.mxu0 0.0
    %2683 = vmatprep.subr.mxu0 0.0
    %2684 = vmatpush1.msra.mxu0 0.0
    %2685 = vmatprep.subr.mxu0 0.0
    %2686 = vmatpush1.msra.mxu0 0.0
    %2687 = vmatprep.subr.mxu0 0.0
    %2688 = vmatpush1.msra.mxu0 0.0
    %2689 = vmatprep.subr.mxu0 0.0
    %2690 = vmatpush1.msra.mxu0 0.0
    %2691 = vmatprep.subr.mxu0 0.0
    %2692 = vmatpush1.msra.mxu0 0.0
    %2693 = vmatprep.subr.mxu0 0.0
    %2694 = vmatpush1.msra.mxu0 0.0
    %2695 = vmatprep.subr.mxu0 0.0
    %2696 = vmatpush1.msra.mxu0 0.0
    %2697 = vmatprep.subr.mxu0 0.0
    %2698 = vmatpush1.msra.mxu0 0.0
    %2699 = vmatprep.subr.mxu0 0.0
    %2700 = vmatpush1.msra.mxu0 0.0
    %2701 = vmatprep.subr.mxu0 0.0
    %2702 = vmatpush1.msra.mxu0 0.0
    %2703 = vmatprep.subr.mxu0 0.0
    %2704 = vmatpush1.msra.mxu0 0.0
    %2705 = vmatprep.subr.mxu0 0.0
    %2706 = vmatpush1.msra.mxu0 0.0
    %2707 = vmatprep.subr.mxu0 0.0
    %2708 = vmatpush1.msra.mxu0 0.0
    %2709 = vmatprep.subr.mxu0 0.0
    %2710 = vmatpush1.msra.mxu0 0.0
    %2711 = vmatprep.subr.mxu0 0.0
    %2712 = vmatpush1.msra.mxu0 0.0
    %2713 = vmatprep.subr.mxu0 0.0
    %2714 = vmatpush1.msra.mxu0 0.0
    %2715 = vmatprep.subr.mxu0 0.0
    %2716 = vmatpush1.msra.mxu0 0.0
    %2717 = vmatprep.subr.mxu0 0.0
    %2718 = vmatpush1.msra.mxu0 0.0
    %2719 = vmatprep.subr.mxu0 0.0
    %2720 = vmatpush1.msra.mxu0 0.0
    %2721 = vmatprep.subr.mxu0 0.0
    %2722 = vmatpush1.msra.mxu0 0.0
    %2723 = vmatprep.subr.mxu0 0.0
    %2724 = vmatpush1.msra.mxu0 0.0
    %2725 = vmatprep.subr.mxu0 0.0
    %2726 = vmatpush1.msra.mxu0 0.0
    %2727 = vmatprep.subr.mxu0 0.0
    %2728 = vmatpush1.msra.mxu0 0.0
    %2729 = vmatprep.mubr.f32.mxu0 0.0
    %2730 = vmatmul.mubr.f32.gmra.mrb[0].mxu0 %v2660
    %v2731 = vpop.f32.mrb[0].mxu0
    %v2732 = vadd.f32 %v2658, %v2731
    %v2733 = vpop.f32.mrb[0].mxu0
    %2734 = vmatprep.mubr.f32.mxu0 0.0
    %2735 = vmatmul.mubr.f32.gmra.mrb[0].mxu0 %v2663
    %v2736 = vpop.f32.mrb[0].mxu0
    %v2737 = vadd.f32 %v2658, %v2736
    %v2738 = vpop.f32.mrb[0].mxu0
    %2739 = vdwg.mxu0
    %v2740 = vadd.f32 %v12, %v2732
    %v2741 = vadd.f32 %v13, %v2737
    %v2742 = vsel %vm94, %v2740, 0.0
    %2743 = vadd.xlane.f32.xlu0 %v2742
    %v2744 = vpop.xlane.xlu0 %2743
    %v2745 = vsel %vm94, %v2741, 0.0
    %2746 = vadd.xlane.f32.xlu0 %v2745
    %v2747 = vpop.xlane.xlu0 %2746
    %v2748 = vrcp.pop 32.0
    %v2749 = vmul.f32 %v2744, %v2748
    %v2750 = vmul.f32 %v2747, %v2748
    %v2751 = vsub.f32 %v2740, %v2749
    %v2752 = vsub.f32 %v2741, %v2750
    %v2753 = vmul.f32 %v2751, %v2751
    %v2754 = vmul.f32 %v2752, %v2752
    %v2755 = vsel %vm94, %v2753, 0.0
    %2756 = vadd.xlane.f32.xlu0 %v2755
    %v2757 = vpop.xlane.xlu0 %2756
    %v2758 = vsel %vm94, %v2754, 0.0
    %2759 = vadd.xlane.f32.xlu0 %v2758
    %v2760 = vpop.xlane.xlu0 %2759
    %v2761 = vmul.f32 %v2757, %v2748
    %v2762 = vmul.f32 %v2760, %v2748
    %v2763 = vadd.f32 %v2761, 1e-05
    %v2764 = vadd.f32 %v2762, 1e-05
    %v2765 = vrsqrt.pop %v2763
    %v2766 = vrsqrt.pop %v2764
    %v2767 = vmul.f32 %v2751, %v2765
    %v2768 = vmul.f32 %v2752, %v2766
    %v2769 = vlaneseq
    %v2770 = vshrl.u32 %v2769, 7
    %v2771 = vsub.s32 1, %v2770
    %v2772 = vrot.slane %v44, %v2771
    %v2773 = vmul.f32 %v2767, %v2772
    %v2774 = vmul.f32 %v2768, %v2772
    %v2775 = vlaneseq
    %v2776 = vshrl.u32 %v2775, 7
    %v2777 = vsub.s32 2, %v2776
    %v2778 = vrot.slane %v44, %v2777
    %v2779 = vadd.f32 %v2773, %v2778
    %v2780 = vadd.f32 %v2774, %v2778
    %v2781 = vlaneseq
    %v2782 = vshrl.u32 %v2781, 7
    %v2783 = vsub.s32 0, %v2782
    %v2784 = vrot.slane %v35, %v2783
    %v2786 = vsel %vm94, %v2779, 0
    %v2789 = vsel %vm94, %v2780, 0
    %2791 = vmatprep.subr.mxu0 0.0
    %2792 = vmatpush1.msra.mxu0 %v31
    %2793 = vmatprep.subr.mxu0 0.0
    %2794 = vmatpush1.msra.mxu0 %v32
    %2795 = vmatprep.subr.mxu0 0.0
    %2796 = vmatpush1.msra.mxu0 %v33
    %2797 = vmatprep.subr.mxu0 0.0
    %2798 = vmatpush1.msra.mxu0 %v34
    %2799 = vmatprep.subr.mxu0 0.0
    %2800 = vmatpush1.msra.mxu0 0.0
    %2801 = vmatprep.subr.mxu0 0.0
    %2802 = vmatpush1.msra.mxu0 0.0
    %2803 = vmatprep.subr.mxu0 0.0
    %2804 = vmatpush1.msra.mxu0 0.0
    %2805 = vmatprep.subr.mxu0 0.0
    %2806 = vmatpush1.msra.mxu0 0.0
    %2807 = vmatprep.subr.mxu0 0.0
    %2808 = vmatpush1.msra.mxu0 0.0
    %2809 = vmatprep.subr.mxu0 0.0
    %2810 = vmatpush1.msra.mxu0 0.0
    %2811 = vmatprep.subr.mxu0 0.0
    %2812 = vmatpush1.msra.mxu0 0.0
    %2813 = vmatprep.subr.mxu0 0.0
    %2814 = vmatpush1.msra.mxu0 0.0
    %2815 = vmatprep.subr.mxu0 0.0
    %2816 = vmatpush1.msra.mxu0 0.0
    %2817 = vmatprep.subr.mxu0 0.0
    %2818 = vmatpush1.msra.mxu0 0.0
    %2819 = vmatprep.subr.mxu0 0.0
    %2820 = vmatpush1.msra.mxu0 0.0
    %2821 = vmatprep.subr.mxu0 0.0
    %2822 = vmatpush1.msra.mxu0 0.0
    %2823 = vmatprep.subr.mxu0 0.0
    %2824 = vmatpush1.msra.mxu0 0.0
    %2825 = vmatprep.subr.mxu0 0.0
    %2826 = vmatpush1.msra.mxu0 0.0
    %2827 = vmatprep.subr.mxu0 0.0
    %2828 = vmatpush1.msra.mxu0 0.0
    %2829 = vmatprep.subr.mxu0 0.0
    %2830 = vmatpush1.msra.mxu0 0.0
    %2831 = vmatprep.subr.mxu0 0.0
    %2832 = vmatpush1.msra.mxu0 0.0
    %2833 = vmatprep.subr.mxu0 0.0
    %2834 = vmatpush1.msra.mxu0 0.0
    %2835 = vmatprep.subr.mxu0 0.0
    %2836 = vmatpush1.msra.mxu0 0.0
    %2837 = vmatprep.subr.mxu0 0.0
    %2838 = vmatpush1.msra.mxu0 0.0
    %2839 = vmatprep.subr.mxu0 0.0
    %2840 = vmatpush1.msra.mxu0 0.0
    %2841 = vmatprep.subr.mxu0 0.0
    %2842 = vmatpush1.msra.mxu0 0.0
    %2843 = vmatprep.subr.mxu0 0.0
    %2844 = vmatpush1.msra.mxu0 0.0
    %2845 = vmatprep.subr.mxu0 0.0
    %2846 = vmatpush1.msra.mxu0 0.0
    %2847 = vmatprep.subr.mxu0 0.0
    %2848 = vmatpush1.msra.mxu0 0.0
    %2849 = vmatprep.subr.mxu0 0.0
    %2850 = vmatpush1.msra.mxu0 0.0
    %2851 = vmatprep.subr.mxu0 0.0
    %2852 = vmatpush1.msra.mxu0 0.0
    %2853 = vmatprep.subr.mxu0 0.0
    %2854 = vmatpush1.msra.mxu0 0.0
    %2855 = vmatprep.mubr.f32.mxu0 0.0
    %2856 = vmatmul.mubr.f32.gmra.mrb[0].mxu0 %v2786
    %v2857 = vpop.f32.mrb[0].mxu0
    %v2858 = vadd.f32 %v2784, %v2857
    %v2859 = vpop.f32.mrb[0].mxu0
    %2860 = vmatprep.mubr.f32.mxu0 0.0
    %2861 = vmatmul.mubr.f32.gmra.mrb[0].mxu0 %v2789
    %v2862 = vpop.f32.mrb[0].mxu0
    %v2863 = vadd.f32 %v2784, %v2862
    %v2864 = vpop.f32.mrb[0].mxu0
    %2865 = vdwg.mxu0
    %v2866 = vmax.f32 %v2858, 0.0
    %v2867 = vmax.f32 %v2863, 0.0
    %v2868 = vlaneseq
    %v2869 = vshrl.u32 %v2868, 7
    %v2870 = vsub.s32 3, %v2869
    %v2871 = vrot.slane %v44, %v2870
    %v2873 = vsel %vm97, %v2866, 0
    %v2876 = vsel %vm97, %v2867, 0
    %2878 = vmatprep.subr.mxu0 0.0
    %2879 = vmatpush1.msra.mxu0 %v36
    %2880 = vmatprep.subr.mxu0 0.0
    %2881 = vmatpush1.msra.mxu0 %v37
    %2882 = vmatprep.subr.mxu0 0.0
    %2883 = vmatpush1.msra.mxu0 %v38
    %2884 = vmatprep.subr.mxu0 0.0
    %2885 = vmatpush1.msra.mxu0 %v39
    %2886 = vmatprep.subr.mxu0 0.0
    %2887 = vmatpush1.msra.mxu0 %v40
    %2888 = vmatprep.subr.mxu0 0.0
    %2889 = vmatpush1.msra.mxu0 %v41
    %2890 = vmatprep.subr.mxu0 0.0
    %2891 = vmatpush1.msra.mxu0 %v42
    %2892 = vmatprep.subr.mxu0 0.0
    %2893 = vmatpush1.msra.mxu0 %v43
    %2894 = vmatprep.subr.mxu0 0.0
    %2895 = vmatpush1.msra.mxu0 0.0
    %2896 = vmatprep.subr.mxu0 0.0
    %2897 = vmatpush1.msra.mxu0 0.0
    %2898 = vmatprep.subr.mxu0 0.0
    %2899 = vmatpush1.msra.mxu0 0.0
    %2900 = vmatprep.subr.mxu0 0.0
    %2901 = vmatpush1.msra.mxu0 0.0
    %2902 = vmatprep.subr.mxu0 0.0
    %2903 = vmatpush1.msra.mxu0 0.0
    %2904 = vmatprep.subr.mxu0 0.0
    %2905 = vmatpush1.msra.mxu0 0.0
    %2906 = vmatprep.subr.mxu0 0.0
    %2907 = vmatpush1.msra.mxu0 0.0
    %2908 = vmatprep.subr.mxu0 0.0
    %2909 = vmatpush1.msra.mxu0 0.0
    %2910 = vmatprep.subr.mxu0 0.0
    %2911 = vmatpush1.msra.mxu0 0.0
    %2912 = vmatprep.subr.mxu0 0.0
    %2913 = vmatpush1.msra.mxu0 0.0
    %2914 = vmatprep.subr.mxu0 0.0
    %2915 = vmatpush1.msra.mxu0 0.0
    %2916 = vmatprep.subr.mxu0 0.0
    %2917 = vmatpush1.msra.mxu0 0.0
    %2918 = vmatprep.subr.mxu0 0.0
    %2919 = vmatpush1.msra.mxu0 0.0
    %2920 = vmatprep.subr.mxu0 0.0
    %2921 = vmatpush1.msra.mxu0 0.0
    %2922 = vmatprep.subr.mxu0 0.0
    %2923 = vmatpush1.msra.mxu0 0.0
    %2924 = vmatprep.subr.mxu0 0.0
    %2925 = vmatpush1.msra.mxu0 0.0
    %2926 = vmatprep.subr.mxu0 0.0
    %2927 = vmatpush1.msra.mxu0 0.0
    %2928 = vmatprep.subr.mxu0 0.0
    %2929 = vmatpush1.msra.mxu0 0.0
    %2930 = vmatprep.subr.mxu0 0.0
    %2931 = vmatpush1.msra.mxu0 0.0
    %2932 = vmatprep.subr.mxu0 0.0
    %2933 = vmatpush1.msra.mxu0 0.0
    %2934 = vmatprep.subr.mxu0 0.0
    %2935 = vmatpush1.msra.mxu0 0.0
    %2936 = vmatprep.subr.mxu0 0.0
    %2937 = vmatpush1.msra.mxu0 0.0
    %2938 = vmatprep.subr.mxu0 0.0
    %2939 = vmatpush1.msra.mxu0 0.0
    %2940 = vmatprep.subr.mxu0 0.0
    %2941 = vmatpush1.msra.mxu0 0.0
    %2942 = vmatprep.mubr.f32.mxu0 0.0
    %2943 = vmatmul.mubr.f32.gmra.mrb[0].mxu0 %v2873
    %v2944 = vpop.f32.mrb[0].mxu0
    %v2945 = vadd.f32 %v2871, %v2944
    %v2946 = vpop.f32.mrb[0].mxu0
    %2947 = vmatprep.mubr.f32.mxu0 0.0
    %2948 = vmatmul.mubr.f32.gmra.mrb[0].mxu0 %v2876
    %v2949 = vpop.f32.mrb[0].mxu0
    %v2950 = vadd.f32 %v2871, %v2949
    %v2951 = vpop.f32.mrb[0].mxu0
    %2952 = vdwg.mxu0
    %v2953 = vadd.f32 %v2779, %v2945
    %v2954 = vadd.f32 %v2780, %v2950
    %v2955 = vsel %vm94, %v2953, 0.0
    %2956 = vadd.xlane.f32.xlu0 %v2955
    %v2957 = vpop.xlane.xlu0 %2956
    %v2958 = vsel %vm94, %v2954, 0.0
    %2959 = vadd.xlane.f32.xlu0 %v2958
    %v2960 = vpop.xlane.xlu0 %2959
    %v2961 = vmul.f32 %v2957, %v2748
    %v2962 = vmul.f32 %v2960, %v2748
    %v2963 = vsub.f32 %v2953, %v2961
    %v2964 = vsub.f32 %v2954, %v2962
    %v2965 = vmul.f32 %v2963, %v2963
    %v2966 = vmul.f32 %v2964, %v2964
    %v2967 = vsel %vm94, %v2965, 0.0
    %2968 = vadd.xlane.f32.xlu0 %v2967
    %v2969 = vpop.xlane.xlu0 %2968
    %v2970 = vsel %vm94, %v2966, 0.0
    %2971 = vadd.xlane.f32.xlu0 %v2970
    %v2972 = vpop.xlane.xlu0 %2971
    %v2973 = vmul.f32 %v2969, %v2748
    %v2974 = vmul.f32 %v2972, %v2748
    %v2975 = vadd.f32 %v2973, 1e-05
    %v2976 = vadd.f32 %v2974, 1e-05
    %v2977 = vrsqrt.pop %v2975
    %v2978 = vrsqrt.pop %v2976
    %v2979 = vmul.f32 %v2963, %v2977
    %v2980 = vmul.f32 %v2964, %v2978
    %v2981 = vlaneseq
    %v2982 = vshrl.u32 %v2981, 7
    %v2983 = vsub.s32 4, %v2982
    %v2984 = vrot.slane %v44, %v2983
    %v2985 = vmul.f32 %v2979, %v2984
    %v2986 = vmul.f32 %v2980, %v2984
    %v2987 = vlaneseq
    %v2988 = vshrl.u32 %v2987, 7
    %v2989 = vsub.s32 5, %v2988
    %v2990 = vrot.slane %v44, %v2989
    %v2991 = vadd.f32 %v2985, %v2990
    %v2992 = vadd.f32 %v2986, %v2990
    %2993 = vst.msk [vmem:[#allocation2] sm:$0xff] %vm94, %v2991
    %2994 = vst.msk [vmem:[#allocation2 + $0x8] sm:$0xff] %vm94, %v2992
    // Predicated region
    $region10: #{tpu_custom_call.1} parent=1 // pred_check
      _
    $region11: #{tpu_custom_call.1} parent=1 // pred_check_branch
      %2996 = sbr.rel (0) target = $region13
    $region12: #{tpu_custom_call.1} parent=1 // pred_region
      %s2998 = ssub.s32 256, 256
      %2999 = vsyncadd [#allocation3], %s2998
      %s3000 = sshll.u32 [#allocation2], 4
      %s3001 = int_to_ptr.vmem [resolvable:$true] %s3000
      %3006 = dma.vmem_to_hbm [thread:$0]  %s3001, 256, %s2, [#allocation3], 128, 128, 8
    $region13: #{tpu_custom_call.1} parent=1 // pred_fallthru
      _
    // Predicated region
    $region14: #{tpu_custom_call.1} parent=1 // pred_check
      _
    $region15: #{tpu_custom_call.1} parent=1 // pred_check_branch
      %3008 = sbr.rel (0) target = $region17
    $region16: #{tpu_custom_call.1} parent=1 // pred_region
      %3009 = dma.done [#allocation3], 256
    $region17: #{tpu_custom_call.1} parent=1 // pred_fallthru
      _
    %3010 = vsyncpa [#allocation3], 1

</llo_original>
